<compile_context>
chip_gen: v5e
topology: v5e:2x2
jax: 0.10.0
libtpu: 0.0.40
codegen_flags: <defaults>
</compile_context>

<pallas_src>
import functools

import jax
import jax.numpy as jnp
from jax.experimental import pallas as pl
from jax.experimental.pallas import tpu as pltpu


def _round_up(x, m):
    return (x + m - 1) // m * m


def _lstm_snp_kernel(gx_ref, whh_ref, out_ref, hN_ref, cN_ref, h_scr, c_scr,
                     *, seq_len, block_t, masked):
    """One grid step == `block_t` time steps of the recurrence.

    gx_ref  : (Bb, block_t, 4Hp) bf16  precomputed x@Wih^T + bias (gate order i,f,o,g)
    whh_ref : (Hp, 4Hp)          bf16  hidden->gates weights (pre-transposed)
    out_ref : (Bb, block_t, Hp)        hidden states for this time block
    hN_ref  : (Bb, Hp)                 final hidden state (resident, written on last t block)
    cN_ref  : (Bb, Hp)                 final cell state
    h_scr   : (Bb, Hp) f32             carried hidden state (VMEM scratch)
    c_scr   : (Bb, Hp) f32             carried cell state   (VMEM scratch)
    """
    tb = pl.program_id(1)

    @pl.when(tb == 0)
    def _():
        h_scr[...] = jnp.zeros_like(h_scr)
        c_scr[...] = jnp.zeros_like(c_scr)

    Hp = h_scr.shape[-1]
    whh = whh_ref[...]                              # (Hp, 4Hp) bf16, loaded once
    gx_all = gx_ref[...].astype(jnp.float32)        # (Bb, block_t, 4Hp)

    h = h_scr[...]
    c = c_scr[...]
    outs = []
    for step in range(block_t):                     # static unroll
        gates = gx_all[:, step, :] + jnp.dot(
            h.astype(jnp.bfloat16), whh, preferred_element_type=jnp.float32)
        # Gate layout is (i | f | o | g), each Hp wide: one EUP tanh per element.
        sig = 0.5 * (jnp.tanh(0.5 * gates[:, :3 * Hp]) + 1.0)   # sigmoid(i,f,o)
        i_g = sig[:, 0 * Hp:1 * Hp]
        f_g = sig[:, 1 * Hp:2 * Hp]
        o_g = sig[:, 2 * Hp:3 * Hp]
        g_g = jnp.tanh(gates[:, 3 * Hp:])

        c_new = f_g * c + i_g * g_g
        h_new = o_g * jnp.tanh(c_new)

        if masked:
            valid = (tb * block_t + step) < seq_len
            c = jnp.where(valid, c_new, c)
            h = jnp.where(valid, h_new, h)
        else:
            c = c_new
            h = h_new
        outs.append(h_new)

    h_scr[...] = h
    c_scr[...] = c
    # One contiguous, lane-dense store for the whole time block.
    out_ref[...] = jnp.stack(outs, axis=1).astype(out_ref.dtype)

    @pl.when(tb == pl.num_programs(1) - 1)
    def _():
        hN_ref[...] = h.astype(hN_ref.dtype)
        cN_ref[...] = c.astype(cN_ref.dtype)


@functools.partial(jax.jit, static_argnames=("hidden_size",))
def snp_lstm_forward(x, w_ih, w_hh, b_ih, b_hh, *, hidden_size):
    """x: (B, T, D) batch-first.  Returns (output (B, T, H), (h_n, c_n))."""
    B, T, D = x.shape
    H = hidden_size

    Hp = _round_up(H, 128)                     # lane-dense hidden size
    B8 = _round_up(B, 8)                       # sublane-dense batch
    B_block = min(B8, 128)                     # cap per-block M at one MXU tile
    B_pad = _round_up(B, B_block)
    num_b_blocks = B_pad // B_block

    # Time blocking: amortize per-grid-step overhead; keep blocks sublane-aligned
    # (multiples of 16 for bf16 inputs, or the full padded time dim when small).
    T8 = _round_up(T, 8)
    if T8 <= 32:
        block_t = T8
    else:
        block_t = min((16, 32), key=lambda bt: (_round_up(T, bt) - T, -bt))
    num_t_blocks = pl.cdiv(T, block_t)
    T_pad = num_t_blocks * block_t
    masked = (T_pad != T)

    # ---- reorder gates (i,f,g,o) -> (i,f,o,g) and pad H -> Hp -----------------
    def reorder_pad(w):
        i_w, f_w, g_w, o_w = jnp.split(w, 4, axis=0)
        pad_cfg = [(0, Hp - H)] + [(0, 0)] * (w.ndim - 1)
        return jnp.concatenate(
            [jnp.pad(p, pad_cfg) for p in (i_w, f_w, o_w, g_w)], axis=0)

    w_ih_p = reorder_pad(w_ih)                                   # (4Hp, D)
    w_hh_p = jnp.pad(reorder_pad(w_hh), ((0, 0), (0, Hp - H)))   # (4Hp, Hp)
    bias_p = reorder_pad(b_ih + b_hh)                            # (4Hp,)

    # ---- hoisted input projection: one big bf16 MXU matmul (M = B*T) ----------
    gx = jnp.einsum(
        "btd,gd->btg",
        x.astype(jnp.bfloat16), w_ih_p.astype(jnp.bfloat16),
        preferred_element_type=jnp.float32) + bias_p             # (B, T, 4Hp) f32
    gx = gx.astype(jnp.bfloat16)
    gx = jnp.pad(gx, ((0, B_pad - B), (0, T_pad - T), (0, 0)))   # (B_pad, T_pad, 4Hp)

    whh_t = jnp.transpose(w_hh_p, (1, 0)).astype(jnp.bfloat16)   # (Hp, 4Hp)

    out_dtype = x.dtype
    itemsize = jnp.dtype(out_dtype).itemsize

    # ---- explicit VMEM budget (double-buffered blocks + weights + scratch) ----
    gx_blk = 2 * B_block * block_t * 4 * Hp * 2
    whh_blk = 2 * Hp * 4 * Hp * 2
    out_blk = 2 * B_block * block_t * Hp * itemsize
    state_blk = 2 * 2 * B_block * Hp * itemsize
    scratch_blk = 2 * B_block * Hp * 4
    footprint = gx_blk + whh_blk + out_blk + state_blk + scratch_blk
    vmem_limit = int(min(56 << 20, max(2 * footprint + (4 << 20), 16 << 20)))

    kernel = functools.partial(
        _lstm_snp_kernel, seq_len=T, block_t=block_t, masked=masked)

    out, h_n, c_n = pl.pallas_call(
        kernel,
        out_shape=(
            jax.ShapeDtypeStruct((B_pad, T_pad, Hp), out_dtype),
            jax.ShapeDtypeStruct((B_pad, Hp), out_dtype),
            jax.ShapeDtypeStruct((B_pad, Hp), out_dtype),
        ),
        grid_spec=pltpu.PrefetchScalarGridSpec(
            num_scalar_prefetch=0,
            grid=(num_b_blocks, num_t_blocks),
            in_specs=[
                pl.BlockSpec((B_block, block_t, 4 * Hp), lambda b, t: (b, t, 0)),
                pl.BlockSpec((Hp, 4 * Hp), lambda b, t: (0, 0)),
            ],
            out_specs=[
                pl.BlockSpec((B_block, block_t, Hp), lambda b, t: (b, t, 0)),
                pl.BlockSpec((B_block, Hp), lambda b, t: (b, 0)),
                pl.BlockSpec((B_block, Hp), lambda b, t: (b, 0)),
            ],
            scratch_shapes=[
                pltpu.VMEM((B_block, Hp), jnp.float32),
                pltpu.VMEM((B_block, Hp), jnp.float32),
            ],
        ),
        compiler_params=pltpu.CompilerParams(
            dimension_semantics=("parallel", "arbitrary"),  # batch parallel, time sequential
            vmem_limit_bytes=vmem_limit),
    )(gx, whh_t)

    return out[:B, :T, :H], (h_n[:B, :H], c_n[:B, :H])


def _reference_lstm(x, w_ih, w_hh, b_ih, b_hh, hidden_size):
    """Pure-JAX f32 reference (lax.scan) for correctness checking."""
    B, T, D = x.shape
    H = hidden_size

    def step(carry, x_t):
        h, c = carry
        gates = x_t @ w_ih.T + h @ w_hh.T + b_ih + b_hh
        i = jax.nn.sigmoid(gates[:, 0 * H:1 * H])
        f = jax.nn.sigmoid(gates[:, 1 * H:2 * H])
        g = jnp.tanh(gates[:, 2 * H:3 * H])
        o = jax.nn.sigmoid(gates[:, 3 * H:4 * H])
        c = f * c + i * g
        h = o * jnp.tanh(c)
        return (h, c), h

    h0 = jnp.zeros((B, H), jnp.float32)
    c0 = jnp.zeros((B, H), jnp.float32)
    (h_n, c_n), ys = jax.lax.scan(step, (h0, c0), jnp.transpose(x, (1, 0, 2)))
    return jnp.transpose(ys, (1, 0, 2)), (h_n, c_n)


if __name__ == "__main__":
    B, T, D, H = 2, 8, 16, 32

    key = jax.random.PRNGKey(0)
    k_x, k_wih, k_whh, k_bih, k_bhh = jax.random.split(key, 5)

    scale = 1.0 / jnp.sqrt(H)
    x = jax.random.normal(k_x, (B, T, D), dtype=jnp.float32)
    w_ih = jax.random.uniform(k_wih, (4 * H, D), minval=-scale, maxval=scale,
                              dtype=jnp.float32)
    w_hh = jax.random.uniform(k_whh, (4 * H, H), minval=-scale, maxval=scale,
                              dtype=jnp.float32)
    b_ih = jax.random.uniform(k_bih, (4 * H,), minval=-scale, maxval=scale,
                              dtype=jnp.float32)
    b_hh = jax.random.uniform(k_bhh, (4 * H,), minval=-scale, maxval=scale,
                              dtype=jnp.float32)

    out, (h_n, c_n) = snp_lstm_forward(x, w_ih, w_hh, b_ih, b_hh, hidden_size=H)
    jax.block_until_ready(out)
    jax.block_until_ready(h_n)
    jax.block_until_ready(c_n)

    # Sanity check against a pure-JAX f32 reference.
    # Tolerance is loosened because the kernel runs its matmuls in bf16
    # (with f32 accumulation and f32 carried state).
    ref_out, (ref_h, ref_c) = _reference_lstm(x, w_ih, w_hh, b_ih, b_hh, H)
    assert jnp.allclose(out, ref_out, atol=5e-2, rtol=5e-2)
    assert jnp.allclose(h_n, ref_h, atol=5e-2, rtol=5e-2)
    assert jnp.allclose(c_n, ref_c, atol=5e-2, rtol=5e-2)

    print("KERNEL_OK")
</pallas_src>

<mosaic_0001>
module attributes {stable_mosaic.version = 11 : i64} {
  func.func @_lstm_snp_kernel(%arg0: i32, %arg1: i32, %arg2: memref<8x8x512xbf16, #tpu.memory_space<vmem>>, %arg3: memref<128x512xbf16, #tpu.memory_space<vmem>>, %arg4: memref<8x8x128xf32, #tpu.memory_space<vmem>>, %arg5: memref<8x128xf32, #tpu.memory_space<vmem>>, %arg6: memref<8x128xf32, #tpu.memory_space<vmem>>, %arg7: memref<8x128xf32, #tpu.memory_space<vmem>>, %arg8: memref<8x128xf32, #tpu.memory_space<vmem>>) attributes {dimension_semantics = [#tpu.dimension_semantics<parallel>, #tpu.dimension_semantics<arbitrary>], iteration_bounds = array<i64: 1, 1>, scalar_prefetch = 0 : i64, scratch_operands = 2 : i64, tpu.core_type = #tpu.core_type<tc>, window_params = [{transform_indices = @transform_0, window_bounds = array<i64: 8, 8, 512>}, {pipeline_mode = #tpu.pipeline_mode<synchronous>, transform_indices = @transform_1, window_bounds = array<i64: 128, 512>}, {transform_indices = @transform_2, window_bounds = array<i64: 8, 8, 128>}, {transform_indices = @transform_3, window_bounds = array<i64: 8, 128>}, {transform_indices = @transform_4, window_bounds = array<i64: 8, 128>}]} {
    %c0_i32 = arith.constant 0 : i32
    %0 = arith.cmpi eq, %arg1, %c0_i32 : i32
    %1 = arith.extui %0 : i1 to i32
    %c0_i32_0 = arith.constant 0 : i32
    %2 = arith.cmpi ne, %1, %c0_i32_0 : i32
    scf.if %2 {
      %cst_49 = arith.constant 0.000000e+00 : f32
      %207 = vector.broadcast %cst_49 : f32 to vector<8x128xf32>
      %c0_50 = arith.constant 0 : index
      %c0_51 = arith.constant 0 : index
      %208 = vector.load %arg7[%c0_50, %c0_51] : memref<8x128xf32, #tpu.memory_space<vmem>>, vector<8x128xf32>
      tpu.vector_store %arg7[%c0_50, %c0_51], %207 {strides = array<i32>} : memref<8x128xf32, #tpu.memory_space<vmem>>, vector<8x128xf32>,
      %cst_52 = arith.constant 0.000000e+00 : f32
      %209 = vector.broadcast %cst_52 : f32 to vector<8x128xf32>
      %c0_53 = arith.constant 0 : index
      %c0_54 = arith.constant 0 : index
      %210 = vector.load %arg8[%c0_53, %c0_54] : memref<8x128xf32, #tpu.memory_space<vmem>>, vector<8x128xf32>
      tpu.vector_store %arg8[%c0_53, %c0_54], %209 {strides = array<i32>} : memref<8x128xf32, #tpu.memory_space<vmem>>, vector<8x128xf32>,
    } else {
    }
    %c0 = arith.constant 0 : index
    %c0_1 = arith.constant 0 : index
    %3 = vector.load %arg3[%c0, %c0_1] : memref<128x512xbf16, #tpu.memory_space<vmem>>, vector<128x512xbf16>
    %c0_2 = arith.constant 0 : index
    %c0_3 = arith.constant 0 : index
    %c0_4 = arith.constant 0 : index
    %4 = vector.load %arg2[%c0_2, %c0_3, %c0_4] : memref<8x8x512xbf16, #tpu.memory_space<vmem>>, vector<8x8x512xbf16>
    %5 = arith.extf %4 : vector<8x8x512xbf16> to vector<8x8x512xf32>
    %c0_5 = arith.constant 0 : index
    %c0_6 = arith.constant 0 : index
    %6 = vector.load %arg7[%c0_5, %c0_6] : memref<8x128xf32, #tpu.memory_space<vmem>>, vector<8x128xf32>
    %c0_7 = arith.constant 0 : index
    %c0_8 = arith.constant 0 : index
    %7 = vector.load %arg8[%c0_7, %c0_8] : memref<8x128xf32, #tpu.memory_space<vmem>>, vector<8x128xf32>
    %8 = vector.extract_strided_slice %5 {offsets = [0, 0, 0], sizes = [8, 1, 512], strides = [1, 1, 1]} : vector<8x8x512xf32> to vector<8x1x512xf32>
    %9 = vector.shape_cast %8 : vector<8x1x512xf32> to vector<8x512xf32>
    %10 = arith.truncf %6 : vector<8x128xf32> to vector<8x128xbf16>
    %cst = arith.constant dense<0.000000e+00> : vector<8x512xf32>
    %11 = tpu.matmul %10, %3, %cst {dimension_numbers = #tpu.dot_dimension_numbers<[1], [0], [0], [1], [0, 0, 1, 1], [], []>} : vector<8x128xbf16>, vector<128x512xbf16>, vector<8x512xf32> -> vector<8x512xf32>
    %12 = arith.addf %9, %11 : vector<8x512xf32>
    %13 = vector.extract_strided_slice %12 {offsets = [0, 0], sizes = [8, 384], strides = [1, 1]} : vector<8x512xf32> to vector<8x384xf32>
    %cst_9 = arith.constant 5.000000e-01 : f32
    %14 = vector.broadcast %cst_9 : f32 to vector<8x384xf32>
    %15 = arith.mulf %14, %13 : vector<8x384xf32>
    %16 = math.tanh %15 : vector<8x384xf32>
    %cst_10 = arith.constant 1.000000e+00 : f32
    %17 = vector.broadcast %cst_10 : f32 to vector<8x384xf32>
    %18 = arith.addf %16, %17 : vector<8x384xf32>
    %cst_11 = arith.constant 5.000000e-01 : f32
    %19 = vector.broadcast %cst_11 : f32 to vector<8x384xf32>
    %20 = arith.mulf %19, %18 : vector<8x384xf32>
    %21 = vector.extract_strided_slice %20 {offsets = [0, 0], sizes = [8, 128], strides = [1, 1]} : vector<8x384xf32> to vector<8x128xf32>
    %22 = vector.extract_strided_slice %20 {offsets = [0, 128], sizes = [8, 128], strides = [1, 1]} : vector<8x384xf32> to vector<8x128xf32>
    %23 = vector.extract_strided_slice %20 {offsets = [0, 256], sizes = [8, 128], strides = [1, 1]} : vector<8x384xf32> to vector<8x128xf32>
    %24 = vector.extract_strided_slice %12 {offsets = [0, 384], sizes = [8, 128], strides = [1, 1]} : vector<8x512xf32> to vector<8x128xf32>
    %25 = math.tanh %24 : vector<8x128xf32>
    %26 = arith.mulf %22, %7 : vector<8x128xf32>
    %27 = arith.mulf %21, %25 : vector<8x128xf32>
    %28 = arith.addf %26, %27 : vector<8x128xf32>
    %29 = math.tanh %28 : vector<8x128xf32>
    %30 = arith.mulf %23, %29 : vector<8x128xf32>
    %31 = vector.extract_strided_slice %5 {offsets = [0, 1, 0], sizes = [8, 1, 512], strides = [1, 1, 1]} : vector<8x8x512xf32> to vector<8x1x512xf32>
    %32 = vector.shape_cast %31 : vector<8x1x512xf32> to vector<8x512xf32>
    %33 = arith.truncf %30 : vector<8x128xf32> to vector<8x128xbf16>
    %cst_12 = arith.constant dense<0.000000e+00> : vector<8x512xf32>
    %34 = tpu.matmul %33, %3, %cst_12 {dimension_numbers = #tpu.dot_dimension_numbers<[1], [0], [0], [1], [0, 0, 1, 1], [], []>} : vector<8x128xbf16>, vector<128x512xbf16>, vector<8x512xf32> -> vector<8x512xf32>
    %35 = arith.addf %32, %34 : vector<8x512xf32>
    %36 = vector.extract_strided_slice %35 {offsets = [0, 0], sizes = [8, 384], strides = [1, 1]} : vector<8x512xf32> to vector<8x384xf32>
    %cst_13 = arith.constant 5.000000e-01 : f32
    %37 = vector.broadcast %cst_13 : f32 to vector<8x384xf32>
    %38 = arith.mulf %37, %36 : vector<8x384xf32>
    %39 = math.tanh %38 : vector<8x384xf32>
    %cst_14 = arith.constant 1.000000e+00 : f32
    %40 = vector.broadcast %cst_14 : f32 to vector<8x384xf32>
    %41 = arith.addf %39, %40 : vector<8x384xf32>
    %cst_15 = arith.constant 5.000000e-01 : f32
    %42 = vector.broadcast %cst_15 : f32 to vector<8x384xf32>
    %43 = arith.mulf %42, %41 : vector<8x384xf32>
    %44 = vector.extract_strided_slice %43 {offsets = [0, 0], sizes = [8, 128], strides = [1, 1]} : vector<8x384xf32> to vector<8x128xf32>
    %45 = vector.extract_strided_slice %43 {offsets = [0, 128], sizes = [8, 128], strides = [1, 1]} : vector<8x384xf32> to vector<8x128xf32>
    %46 = vector.extract_strided_slice %43 {offsets = [0, 256], sizes = [8, 128], strides = [1, 1]} : vector<8x384xf32> to vector<8x128xf32>
    %47 = vector.extract_strided_slice %35 {offsets = [0, 384], sizes = [8, 128], strides = [1, 1]} : vector<8x512xf32> to vector<8x128xf32>
    %48 = math.tanh %47 : vector<8x128xf32>
    %49 = arith.mulf %45, %28 : vector<8x128xf32>
    %50 = arith.mulf %44, %48 : vector<8x128xf32>
    %51 = arith.addf %49, %50 : vector<8x128xf32>
    %52 = math.tanh %51 : vector<8x128xf32>
    %53 = arith.mulf %46, %52 : vector<8x128xf32>
    %54 = vector.extract_strided_slice %5 {offsets = [0, 2, 0], sizes = [8, 1, 512], strides = [1, 1, 1]} : vector<8x8x512xf32> to vector<8x1x512xf32>
    %55 = vector.shape_cast %54 : vector<8x1x512xf32> to vector<8x512xf32>
    %56 = arith.truncf %53 : vector<8x128xf32> to vector<8x128xbf16>
    %cst_16 = arith.constant dense<0.000000e+00> : vector<8x512xf32>
    %57 = tpu.matmul %56, %3, %cst_16 {dimension_numbers = #tpu.dot_dimension_numbers<[1], [0], [0], [1], [0, 0, 1, 1], [], []>} : vector<8x128xbf16>, vector<128x512xbf16>, vector<8x512xf32> -> vector<8x512xf32>
    %58 = arith.addf %55, %57 : vector<8x512xf32>
    %59 = vector.extract_strided_slice %58 {offsets = [0, 0], sizes = [8, 384], strides = [1, 1]} : vector<8x512xf32> to vector<8x384xf32>
    %cst_17 = arith.constant 5.000000e-01 : f32
    %60 = vector.broadcast %cst_17 : f32 to vector<8x384xf32>
    %61 = arith.mulf %60, %59 : vector<8x384xf32>
    %62 = math.tanh %61 : vector<8x384xf32>
    %cst_18 = arith.constant 1.000000e+00 : f32
    %63 = vector.broadcast %cst_18 : f32 to vector<8x384xf32>
    %64 = arith.addf %62, %63 : vector<8x384xf32>
    %cst_19 = arith.constant 5.000000e-01 : f32
    %65 = vector.broadcast %cst_19 : f32 to vector<8x384xf32>
    %66 = arith.mulf %65, %64 : vector<8x384xf32>
    %67 = vector.extract_strided_slice %66 {offsets = [0, 0], sizes = [8, 128], strides = [1, 1]} : vector<8x384xf32> to vector<8x128xf32>
    %68 = vector.extract_strided_slice %66 {offsets = [0, 128], sizes = [8, 128], strides = [1, 1]} : vector<8x384xf32> to vector<8x128xf32>
    %69 = vector.extract_strided_slice %66 {offsets = [0, 256], sizes = [8, 128], strides = [1, 1]} : vector<8x384xf32> to vector<8x128xf32>
    %70 = vector.extract_strided_slice %58 {offsets = [0, 384], sizes = [8, 128], strides = [1, 1]} : vector<8x512xf32> to vector<8x128xf32>
    %71 = math.tanh %70 : vector<8x128xf32>
    %72 = arith.mulf %68, %51 : vector<8x128xf32>
    %73 = arith.mulf %67, %71 : vector<8x128xf32>
    %74 = arith.addf %72, %73 : vector<8x128xf32>
    %75 = math.tanh %74 : vector<8x128xf32>
    %76 = arith.mulf %69, %75 : vector<8x128xf32>
    %77 = vector.extract_strided_slice %5 {offsets = [0, 3, 0], sizes = [8, 1, 512], strides = [1, 1, 1]} : vector<8x8x512xf32> to vector<8x1x512xf32>
    %78 = vector.shape_cast %77 : vector<8x1x512xf32> to vector<8x512xf32>
    %79 = arith.truncf %76 : vector<8x128xf32> to vector<8x128xbf16>
    %cst_20 = arith.constant dense<0.000000e+00> : vector<8x512xf32>
    %80 = tpu.matmul %79, %3, %cst_20 {dimension_numbers = #tpu.dot_dimension_numbers<[1], [0], [0], [1], [0, 0, 1, 1], [], []>} : vector<8x128xbf16>, vector<128x512xbf16>, vector<8x512xf32> -> vector<8x512xf32>
    %81 = arith.addf %78, %80 : vector<8x512xf32>
    %82 = vector.extract_strided_slice %81 {offsets = [0, 0], sizes = [8, 384], strides = [1, 1]} : vector<8x512xf32> to vector<8x384xf32>
    %cst_21 = arith.constant 5.000000e-01 : f32
    %83 = vector.broadcast %cst_21 : f32 to vector<8x384xf32>
    %84 = arith.mulf %83, %82 : vector<8x384xf32>
    %85 = math.tanh %84 : vector<8x384xf32>
    %cst_22 = arith.constant 1.000000e+00 : f32
    %86 = vector.broadcast %cst_22 : f32 to vector<8x384xf32>
    %87 = arith.addf %85, %86 : vector<8x384xf32>
    %cst_23 = arith.constant 5.000000e-01 : f32
    %88 = vector.broadcast %cst_23 : f32 to vector<8x384xf32>
    %89 = arith.mulf %88, %87 : vector<8x384xf32>
    %90 = vector.extract_strided_slice %89 {offsets = [0, 0], sizes = [8, 128], strides = [1, 1]} : vector<8x384xf32> to vector<8x128xf32>
    %91 = vector.extract_strided_slice %89 {offsets = [0, 128], sizes = [8, 128], strides = [1, 1]} : vector<8x384xf32> to vector<8x128xf32>
    %92 = vector.extract_strided_slice %89 {offsets = [0, 256], sizes = [8, 128], strides = [1, 1]} : vector<8x384xf32> to vector<8x128xf32>
    %93 = vector.extract_strided_slice %81 {offsets = [0, 384], sizes = [8, 128], strides = [1, 1]} : vector<8x512xf32> to vector<8x128xf32>
    %94 = math.tanh %93 : vector<8x128xf32>
    %95 = arith.mulf %91, %74 : vector<8x128xf32>
    %96 = arith.mulf %90, %94 : vector<8x128xf32>
    %97 = arith.addf %95, %96 : vector<8x128xf32>
    %98 = math.tanh %97 : vector<8x128xf32>
    %99 = arith.mulf %92, %98 : vector<8x128xf32>
    %100 = vector.extract_strided_slice %5 {offsets = [0, 4, 0], sizes = [8, 1, 512], strides = [1, 1, 1]} : vector<8x8x512xf32> to vector<8x1x512xf32>
    %101 = vector.shape_cast %100 : vector<8x1x512xf32> to vector<8x512xf32>
    %102 = arith.truncf %99 : vector<8x128xf32> to vector<8x128xbf16>
    %cst_24 = arith.constant dense<0.000000e+00> : vector<8x512xf32>
    %103 = tpu.matmul %102, %3, %cst_24 {dimension_numbers = #tpu.dot_dimension_numbers<[1], [0], [0], [1], [0, 0, 1, 1], [], []>} : vector<8x128xbf16>, vector<128x512xbf16>, vector<8x512xf32> -> vector<8x512xf32>
    %104 = arith.addf %101, %103 : vector<8x512xf32>
    %105 = vector.extract_strided_slice %104 {offsets = [0, 0], sizes = [8, 384], strides = [1, 1]} : vector<8x512xf32> to vector<8x384xf32>
    %cst_25 = arith.constant 5.000000e-01 : f32
    %106 = vector.broadcast %cst_25 : f32 to vector<8x384xf32>
    %107 = arith.mulf %106, %105 : vector<8x384xf32>
    %108 = math.tanh %107 : vector<8x384xf32>
    %cst_26 = arith.constant 1.000000e+00 : f32
    %109 = vector.broadcast %cst_26 : f32 to vector<8x384xf32>
    %110 = arith.addf %108, %109 : vector<8x384xf32>
    %cst_27 = arith.constant 5.000000e-01 : f32
    %111 = vector.broadcast %cst_27 : f32 to vector<8x384xf32>
    %112 = arith.mulf %111, %110 : vector<8x384xf32>
    %113 = vector.extract_strided_slice %112 {offsets = [0, 0], sizes = [8, 128], strides = [1, 1]} : vector<8x384xf32> to vector<8x128xf32>
    %114 = vector.extract_strided_slice %112 {offsets = [0, 128], sizes = [8, 128], strides = [1, 1]} : vector<8x384xf32> to vector<8x128xf32>
    %115 = vector.extract_strided_slice %112 {offsets = [0, 256], sizes = [8, 128], strides = [1, 1]} : vector<8x384xf32> to vector<8x128xf32>
    %116 = vector.extract_strided_slice %104 {offsets = [0, 384], sizes = [8, 128], strides = [1, 1]} : vector<8x512xf32> to vector<8x128xf32>
    %117 = math.tanh %116 : vector<8x128xf32>
    %118 = arith.mulf %114, %97 : vector<8x128xf32>
    %119 = arith.mulf %113, %117 : vector<8x128xf32>
    %120 = arith.addf %118, %119 : vector<8x128xf32>
    %121 = math.tanh %120 : vector<8x128xf32>
    %122 = arith.mulf %115, %121 : vector<8x128xf32>
    %123 = vector.extract_strided_slice %5 {offsets = [0, 5, 0], sizes = [8, 1, 512], strides = [1, 1, 1]} : vector<8x8x512xf32> to vector<8x1x512xf32>
    %124 = vector.shape_cast %123 : vector<8x1x512xf32> to vector<8x512xf32>
    %125 = arith.truncf %122 : vector<8x128xf32> to vector<8x128xbf16>
    %cst_28 = arith.constant dense<0.000000e+00> : vector<8x512xf32>
    %126 = tpu.matmul %125, %3, %cst_28 {dimension_numbers = #tpu.dot_dimension_numbers<[1], [0], [0], [1], [0, 0, 1, 1], [], []>} : vector<8x128xbf16>, vector<128x512xbf16>, vector<8x512xf32> -> vector<8x512xf32>
    %127 = arith.addf %124, %126 : vector<8x512xf32>
    %128 = vector.extract_strided_slice %127 {offsets = [0, 0], sizes = [8, 384], strides = [1, 1]} : vector<8x512xf32> to vector<8x384xf32>
    %cst_29 = arith.constant 5.000000e-01 : f32
    %129 = vector.broadcast %cst_29 : f32 to vector<8x384xf32>
    %130 = arith.mulf %129, %128 : vector<8x384xf32>
    %131 = math.tanh %130 : vector<8x384xf32>
    %cst_30 = arith.constant 1.000000e+00 : f32
    %132 = vector.broadcast %cst_30 : f32 to vector<8x384xf32>
    %133 = arith.addf %131, %132 : vector<8x384xf32>
    %cst_31 = arith.constant 5.000000e-01 : f32
    %134 = vector.broadcast %cst_31 : f32 to vector<8x384xf32>
    %135 = arith.mulf %134, %133 : vector<8x384xf32>
    %136 = vector.extract_strided_slice %135 {offsets = [0, 0], sizes = [8, 128], strides = [1, 1]} : vector<8x384xf32> to vector<8x128xf32>
    %137 = vector.extract_strided_slice %135 {offsets = [0, 128], sizes = [8, 128], strides = [1, 1]} : vector<8x384xf32> to vector<8x128xf32>
    %138 = vector.extract_strided_slice %135 {offsets = [0, 256], sizes = [8, 128], strides = [1, 1]} : vector<8x384xf32> to vector<8x128xf32>
    %139 = vector.extract_strided_slice %127 {offsets = [0, 384], sizes = [8, 128], strides = [1, 1]} : vector<8x512xf32> to vector<8x128xf32>
    %140 = math.tanh %139 : vector<8x128xf32>
    %141 = arith.mulf %137, %120 : vector<8x128xf32>
    %142 = arith.mulf %136, %140 : vector<8x128xf32>
    %143 = arith.addf %141, %142 : vector<8x128xf32>
    %144 = math.tanh %143 : vector<8x128xf32>
    %145 = arith.mulf %138, %144 : vector<8x128xf32>
    %146 = vector.extract_strided_slice %5 {offsets = [0, 6, 0], sizes = [8, 1, 512], strides = [1, 1, 1]} : vector<8x8x512xf32> to vector<8x1x512xf32>
    %147 = vector.shape_cast %146 : vector<8x1x512xf32> to vector<8x512xf32>
    %148 = arith.truncf %145 : vector<8x128xf32> to vector<8x128xbf16>
    %cst_32 = arith.constant dense<0.000000e+00> : vector<8x512xf32>
    %149 = tpu.matmul %148, %3, %cst_32 {dimension_numbers = #tpu.dot_dimension_numbers<[1], [0], [0], [1], [0, 0, 1, 1], [], []>} : vector<8x128xbf16>, vector<128x512xbf16>, vector<8x512xf32> -> vector<8x512xf32>
    %150 = arith.addf %147, %149 : vector<8x512xf32>
    %151 = vector.extract_strided_slice %150 {offsets = [0, 0], sizes = [8, 384], strides = [1, 1]} : vector<8x512xf32> to vector<8x384xf32>
    %cst_33 = arith.constant 5.000000e-01 : f32
    %152 = vector.broadcast %cst_33 : f32 to vector<8x384xf32>
    %153 = arith.mulf %152, %151 : vector<8x384xf32>
    %154 = math.tanh %153 : vector<8x384xf32>
    %cst_34 = arith.constant 1.000000e+00 : f32
    %155 = vector.broadcast %cst_34 : f32 to vector<8x384xf32>
    %156 = arith.addf %154, %155 : vector<8x384xf32>
    %cst_35 = arith.constant 5.000000e-01 : f32
    %157 = vector.broadcast %cst_35 : f32 to vector<8x384xf32>
    %158 = arith.mulf %157, %156 : vector<8x384xf32>
    %159 = vector.extract_strided_slice %158 {offsets = [0, 0], sizes = [8, 128], strides = [1, 1]} : vector<8x384xf32> to vector<8x128xf32>
    %160 = vector.extract_strided_slice %158 {offsets = [0, 128], sizes = [8, 128], strides = [1, 1]} : vector<8x384xf32> to vector<8x128xf32>
    %161 = vector.extract_strided_slice %158 {offsets = [0, 256], sizes = [8, 128], strides = [1, 1]} : vector<8x384xf32> to vector<8x128xf32>
    %162 = vector.extract_strided_slice %150 {offsets = [0, 384], sizes = [8, 128], strides = [1, 1]} : vector<8x512xf32> to vector<8x128xf32>
    %163 = math.tanh %162 : vector<8x128xf32>
    %164 = arith.mulf %160, %143 : vector<8x128xf32>
    %165 = arith.mulf %159, %163 : vector<8x128xf32>
    %166 = arith.addf %164, %165 : vector<8x128xf32>
    %167 = math.tanh %166 : vector<8x128xf32>
    %168 = arith.mulf %161, %167 : vector<8x128xf32>
    %169 = vector.extract_strided_slice %5 {offsets = [0, 7, 0], sizes = [8, 1, 512], strides = [1, 1, 1]} : vector<8x8x512xf32> to vector<8x1x512xf32>
    %170 = vector.shape_cast %169 : vector<8x1x512xf32> to vector<8x512xf32>
    %171 = arith.truncf %168 : vector<8x128xf32> to vector<8x128xbf16>
    %cst_36 = arith.constant dense<0.000000e+00> : vector<8x512xf32>
    %172 = tpu.matmul %171, %3, %cst_36 {dimension_numbers = #tpu.dot_dimension_numbers<[1], [0], [0], [1], [0, 0, 1, 1], [], []>} : vector<8x128xbf16>, vector<128x512xbf16>, vector<8x512xf32> -> vector<8x512xf32>
    %173 = arith.addf %170, %172 : vector<8x512xf32>
    %174 = vector.extract_strided_slice %173 {offsets = [0, 0], sizes = [8, 384], strides = [1, 1]} : vector<8x512xf32> to vector<8x384xf32>
    %cst_37 = arith.constant 5.000000e-01 : f32
    %175 = vector.broadcast %cst_37 : f32 to vector<8x384xf32>
    %176 = arith.mulf %175, %174 : vector<8x384xf32>
    %177 = math.tanh %176 : vector<8x384xf32>
    %cst_38 = arith.constant 1.000000e+00 : f32
    %178 = vector.broadcast %cst_38 : f32 to vector<8x384xf32>
    %179 = arith.addf %177, %178 : vector<8x384xf32>
    %cst_39 = arith.constant 5.000000e-01 : f32
    %180 = vector.broadcast %cst_39 : f32 to vector<8x384xf32>
    %181 = arith.mulf %180, %179 : vector<8x384xf32>
    %182 = vector.extract_strided_slice %181 {offsets = [0, 0], sizes = [8, 128], strides = [1, 1]} : vector<8x384xf32> to vector<8x128xf32>
    %183 = vector.extract_strided_slice %181 {offsets = [0, 128], sizes = [8, 128], strides = [1, 1]} : vector<8x384xf32> to vector<8x128xf32>
    %184 = vector.extract_strided_slice %181 {offsets = [0, 256], sizes = [8, 128], strides = [1, 1]} : vector<8x384xf32> to vector<8x128xf32>
    %185 = vector.extract_strided_slice %173 {offsets = [0, 384], sizes = [8, 128], strides = [1, 1]} : vector<8x512xf32> to vector<8x128xf32>
    %186 = math.tanh %185 : vector<8x128xf32>
    %187 = arith.mulf %183, %166 : vector<8x128xf32>
    %188 = arith.mulf %182, %186 : vector<8x128xf32>
    %189 = arith.addf %187, %188 : vector<8x128xf32>
    %190 = math.tanh %189 : vector<8x128xf32>
    %191 = arith.mulf %184, %190 : vector<8x128xf32>
    %c0_40 = arith.constant 0 : index
    %c0_41 = arith.constant 0 : index
    %192 = vector.load %arg7[%c0_40, %c0_41] : memref<8x128xf32, #tpu.memory_space<vmem>>, vector<8x128xf32>
    tpu.vector_store %arg7[%c0_40, %c0_41], %191 {strides = array<i32>} : memref<8x128xf32, #tpu.memory_space<vmem>>, vector<8x128xf32>,
    %c0_42 = arith.constant 0 : index
    %c0_43 = arith.constant 0 : index
    %193 = vector.load %arg8[%c0_42, %c0_43] : memref<8x128xf32, #tpu.memory_space<vmem>>, vector<8x128xf32>
    tpu.vector_store %arg8[%c0_42, %c0_43], %189 {strides = array<i32>} : memref<8x128xf32, #tpu.memory_space<vmem>>, vector<8x128xf32>,
    %194 = vector.shape_cast %30 : vector<8x128xf32> to vector<8x1x128xf32>
    %195 = vector.shape_cast %53 : vector<8x128xf32> to vector<8x1x128xf32>
    %196 = vector.shape_cast %76 : vector<8x128xf32> to vector<8x1x128xf32>
    %197 = vector.shape_cast %99 : vector<8x128xf32> to vector<8x1x128xf32>
    %198 = vector.shape_cast %122 : vector<8x128xf32> to vector<8x1x128xf32>
    %199 = vector.shape_cast %145 : vector<8x128xf32> to vector<8x1x128xf32>
    %200 = vector.shape_cast %168 : vector<8x128xf32> to vector<8x1x128xf32>
    %201 = vector.shape_cast %191 : vector<8x128xf32> to vector<8x1x128xf32>
    %202 = tpu.concatenate %194, %195, %196, %197, %198, %199, %200, %201 in 1 : vector<8x1x128xf32>, vector<8x1x128xf32>, vector<8x1x128xf32>, vector<8x1x128xf32>, vector<8x1x128xf32>, vector<8x1x128xf32>, vector<8x1x128xf32>, vector<8x1x128xf32> -> vector<8x8x128xf32>
    %c0_44 = arith.constant 0 : index
    %c0_45 = arith.constant 0 : index
    %c0_46 = arith.constant 0 : index
    %203 = vector.load %arg4[%c0_44, %c0_45, %c0_46] : memref<8x8x128xf32, #tpu.memory_space<vmem>>, vector<8x8x128xf32>
    tpu.vector_store %arg4[%c0_44, %c0_45, %c0_46], %202 {strides = array<i32>} : memref<8x8x128xf32, #tpu.memory_space<vmem>>, vector<8x8x128xf32>,
    %c0_i32_47 = arith.constant 0 : i32
    %204 = arith.cmpi eq, %arg1, %c0_i32_47 : i32
    %205 = arith.extui %204 : i1 to i32
    %c0_i32_48 = arith.constant 0 : i32
    %206 = arith.cmpi ne, %205, %c0_i32_48 : i32
    scf.if %206 {
      %c0_49 = arith.constant 0 : index
      %c0_50 = arith.constant 0 : index
      %207 = vector.load %arg5[%c0_49, %c0_50] : memref<8x128xf32, #tpu.memory_space<vmem>>, vector<8x128xf32>
      tpu.vector_store %arg5[%c0_49, %c0_50], %191 {strides = array<i32>} : memref<8x128xf32, #tpu.memory_space<vmem>>, vector<8x128xf32>,
      %c0_51 = arith.constant 0 : index
      %c0_52 = arith.constant 0 : index
      %208 = vector.load %arg6[%c0_51, %c0_52] : memref<8x128xf32, #tpu.memory_space<vmem>>, vector<8x128xf32>
      tpu.vector_store %arg6[%c0_51, %c0_52], %189 {strides = array<i32>} : memref<8x128xf32, #tpu.memory_space<vmem>>, vector<8x128xf32>,
    } else {
    }
    return
  }
  func.func @transform_0(%arg0: i32, %arg1: i32) -> (i32, i32, i32) {
    %c0_i32 = arith.constant 0 : i32
    %c0_i32_0 = arith.constant 0 : i32
    return %arg0, %arg1, %c0_i32 : i32, i32, i32
  }
  func.func @transform_1(%arg0: i32, %arg1: i32) -> (i32, i32) {
    %c0_i32 = arith.constant 0 : i32
    %c0_i32_0 = arith.constant 0 : i32
    %c0_i32_1 = arith.constant 0 : i32
    return %c0_i32, %c0_i32_0 : i32, i32
  }
  func.func @transform_2(%arg0: i32, %arg1: i32) -> (i32, i32, i32) {
    %c0_i32 = arith.constant 0 : i32
    %c0_i32_0 = arith.constant 0 : i32
    return %arg0, %arg1, %c0_i32 : i32, i32, i32
  }
  func.func @transform_3(%arg0: i32, %arg1: i32) -> (i32, i32) {
    %c0_i32 = arith.constant 0 : i32
    %c0_i32_0 = arith.constant 0 : i32
    return %arg0, %c0_i32 : i32, i32
  }
  func.func @transform_4(%arg0: i32, %arg1: i32) -> (i32, i32) {
    %c0_i32 = arith.constant 0 : i32
    %c0_i32_0 = arith.constant 0 : i32
    return %arg0, %c0_i32 : i32, i32
  }
}

</mosaic_0001>

<llo_original>
// kernel: snp_lstm_forward.1
$region0: #{snp_lstm_forward.1}
  #allocation0 [shape = 'u32[]', space=smem, size = 0x4, offset = 0x4, fixed_abs, tag = 'smem constant byte address 0x4 - core index']
  #allocation1 [shape = 'u32[72,128]{1,0:T(1,128)}', space=vmem, size = 0x9000, scoped, tag = 'internal scratch']
  #allocation2 [shape = 'f32[8,128]{1,0:T(8,128)}', space=vmem, size = 0x1000, scoped, tag = 'scratch operand']
  #allocation3 [shape = 'f32[8,128]{1,0:T(8,128)}', space=vmem, size = 0x1000, scoped, tag = 'scratch operand']
  %s0 = inlined_call_operand.vmem [shape: bf16[8,8,512], index: 0, kind: input, shape index: {}]
  %s1 = inlined_call_operand.vmem [shape: bf16[128,512], index: 1, kind: input, shape index: {}]
  %s2 = inlined_call_operand.vmem [shape: f32[8,8,128], index: 2, kind: output, shape index: {0}]
  %s3 = inlined_call_operand.vmem [shape: f32[8,128], index: 3, kind: output, shape index: {1}]
  %s4 = inlined_call_operand.vmem [shape: f32[8,128], index: 4, kind: output, shape index: {2}]
  %5 = xla_tuple %s2, %s3, %s4
  %s6 = sld [smem:[#allocation0]]
  $region42: #{snp_lstm_forward.1} parent=0
    _
  %s8 = ssub.s32 1, %s6
  %s9 = scalar_select 0, %s8, %s6
  // Predicated region
  $region2: #{snp_lstm_forward.1} parent=0 // pred_check
    _
  $region3: #{snp_lstm_forward.1} parent=0 // pred_check_branch
    %11 = sbr.rel (0) target = $region5
  $region4: #{snp_lstm_forward.1} parent=0 // pred_region
    _
  $region5: #{snp_lstm_forward.1} parent=0 // pred_fallthru
    _
  // Predicated region
  $region6: #{snp_lstm_forward.1} parent=0 // pred_check
    _
  $region7: #{snp_lstm_forward.1} parent=0 // pred_check_branch
    %13 = sbr.rel (0) target = $region9
  $region8: #{snp_lstm_forward.1} parent=0 // pred_region
    _
  $region9: #{snp_lstm_forward.1} parent=0 // pred_fallthru
    _
  %p14 = scmp.eq.s32.totalorder 0, 0
  // Predicated region
  $region10: #{snp_lstm_forward.1} parent=0 // pred_check
    %p15 = pneg %p14
  $region11: #{snp_lstm_forward.1} parent=0 // pred_check_branch
    %17 = sbr.rel (%p15) target = $region13
  $region12: #{snp_lstm_forward.1} parent=0 // pred_region
    %18 = vst [vmem:[#allocation2] sm:$0xff] 0.0
    %19 = vst [vmem:[#allocation3] sm:$0xff] 0.0
  $region13: #{snp_lstm_forward.1} parent=0 // pred_fallthru
    _
  %v20 = vld [vmem:[%s1] sm:$0xff]
  %v21 = vld [vmem:[%s1 + $0x8] sm:$0xff]
  %v22 = vld [vmem:[%s1 + $0x10] sm:$0xff]
  %v23 = vld [vmem:[%s1 + $0x18] sm:$0xff]
  %v24 = vld [vmem:[%s1 + $0x20] sm:$0xff]
  %v25 = vld [vmem:[%s1 + $0x28] sm:$0xff]
  %v26 = vld [vmem:[%s1 + $0x30] sm:$0xff]
  %v27 = vld [vmem:[%s1 + $0x38] sm:$0xff]
  %v28 = vld [vmem:[%s1 + $0x40] sm:$0xff]
  %v29 = vld [vmem:[%s1 + $0x48] sm:$0xff]
  %v30 = vld [vmem:[%s1 + $0x50] sm:$0xff]
  %v31 = vld [vmem:[%s1 + $0x58] sm:$0xff]
  %v32 = vld [vmem:[%s1 + $0x60] sm:$0xff]
  %v33 = vld [vmem:[%s1 + $0x68] sm:$0xff]
  %v34 = vld [vmem:[%s1 + $0x70] sm:$0xff]
  %v35 = vld [vmem:[%s1 + $0x78] sm:$0xff]
  %v36 = vld [vmem:[%s1 + $0x80] sm:$0xff]
  %v37 = vld [vmem:[%s1 + $0x88] sm:$0xff]
  %v38 = vld [vmem:[%s1 + $0x90] sm:$0xff]
  %v39 = vld [vmem:[%s1 + $0x98] sm:$0xff]
  %v40 = vld [vmem:[%s1 + $0xa0] sm:$0xff]
  %v41 = vld [vmem:[%s1 + $0xa8] sm:$0xff]
  %v42 = vld [vmem:[%s1 + $0xb0] sm:$0xff]
  %v43 = vld [vmem:[%s1 + $0xb8] sm:$0xff]
  %v44 = vld [vmem:[%s1 + $0xc0] sm:$0xff]
  %v45 = vld [vmem:[%s1 + $0xc8] sm:$0xff]
  %v46 = vld [vmem:[%s1 + $0xd0] sm:$0xff]
  %v47 = vld [vmem:[%s1 + $0xd8] sm:$0xff]
  %v48 = vld [vmem:[%s1 + $0xe0] sm:$0xff]
  %v49 = vld [vmem:[%s1 + $0xe8] sm:$0xff]
  %v50 = vld [vmem:[%s1 + $0xf0] sm:$0xff]
  %v51 = vld [vmem:[%s1 + $0xf8] sm:$0xff]
  %v52 = vld [vmem:[%s0] sm:$0xff]
  %v53 = vld [vmem:[%s0 + $0x8] sm:$0xff]
  %v54 = vld [vmem:[%s0 + $0x10] sm:$0xff]
  %v55 = vld [vmem:[%s0 + $0x18] sm:$0xff]
  %v56 = vld [vmem:[%s0 + $0x20] sm:$0xff]
  %v57 = vld [vmem:[%s0 + $0x28] sm:$0xff]
  %v58 = vld [vmem:[%s0 + $0x30] sm:$0xff]
  %v59 = vld [vmem:[%s0 + $0x38] sm:$0xff]
  %v60 = vld [vmem:[%s0 + $0x40] sm:$0xff]
  %v61 = vld [vmem:[%s0 + $0x48] sm:$0xff]
  %v62 = vld [vmem:[%s0 + $0x50] sm:$0xff]
  %v63 = vld [vmem:[%s0 + $0x58] sm:$0xff]
  %v64 = vld [vmem:[%s0 + $0x60] sm:$0xff]
  %v65 = vld [vmem:[%s0 + $0x68] sm:$0xff]
  %v66 = vld [vmem:[%s0 + $0x70] sm:$0xff]
  %v67 = vld [vmem:[%s0 + $0x78] sm:$0xff]
  %v68 = vunpack.c.l.bf16 %v52
  %v69 = vunpack.c.h.bf16 %v52
  %v70 = vunpack.c.l.bf16 %v53
  %v71 = vunpack.c.h.bf16 %v53
  %v72 = vunpack.c.l.bf16 %v54
  %v73 = vunpack.c.h.bf16 %v54
  %v74 = vunpack.c.l.bf16 %v55
  %v75 = vunpack.c.h.bf16 %v55
  %v76 = vunpack.c.l.bf16 %v56
  %v77 = vunpack.c.h.bf16 %v56
  %v78 = vunpack.c.l.bf16 %v57
  %v79 = vunpack.c.h.bf16 %v57
  %v80 = vunpack.c.l.bf16 %v58
  %v81 = vunpack.c.h.bf16 %v58
  %v82 = vunpack.c.l.bf16 %v59
  %v83 = vunpack.c.h.bf16 %v59
  %v84 = vunpack.c.l.bf16 %v60
  %v85 = vunpack.c.h.bf16 %v60
  %v86 = vunpack.c.l.bf16 %v61
  %v87 = vunpack.c.h.bf16 %v61
  %v88 = vunpack.c.l.bf16 %v62
  %v89 = vunpack.c.h.bf16 %v62
  %v90 = vunpack.c.l.bf16 %v63
  %v91 = vunpack.c.h.bf16 %v63
  %v92 = vunpack.c.l.bf16 %v64
  %v93 = vunpack.c.h.bf16 %v64
  %v94 = vunpack.c.l.bf16 %v65
  %v95 = vunpack.c.h.bf16 %v65
  %v96 = vunpack.c.l.bf16 %v66
  %v97 = vunpack.c.h.bf16 %v66
  %v98 = vunpack.c.l.bf16 %v67
  %v99 = vunpack.c.h.bf16 %v67
  %v100 = vld [vmem:[#allocation2] sm:$0xff]
  %v101 = vld [vmem:[#allocation3] sm:$0xff]
  %v102 = vpack.c.bf16 %v100, %v100
  %v135 = vunpack.c.l.b16 %v20
  %v136 = vunpack.c.h.b16 %v20
  %v137 = vunpack.c.l.b16 %v21
  %v138 = vunpack.c.h.b16 %v21
  %v139 = vunpack.c.l.b16 %v22
  %v140 = vunpack.c.h.b16 %v22
  %v141 = vunpack.c.l.b16 %v23
  %v142 = vunpack.c.h.b16 %v23
  %v143 = vunpack.c.l.b16 %v24
  %v144 = vunpack.c.h.b16 %v24
  %v145 = vunpack.c.l.b16 %v25
  %v146 = vunpack.c.h.b16 %v25
  %v147 = vunpack.c.l.b16 %v26
  %v148 = vunpack.c.h.b16 %v26
  %v149 = vunpack.c.l.b16 %v27
  %v150 = vunpack.c.h.b16 %v27
  %v151 = vunpack.c.l.b16 %v28
  %v152 = vunpack.c.h.b16 %v28
  %v153 = vunpack.c.l.b16 %v29
  %v154 = vunpack.c.h.b16 %v29
  %v155 = vunpack.c.l.b16 %v30
  %v156 = vunpack.c.h.b16 %v30
  %v157 = vunpack.c.l.b16 %v31
  %v158 = vunpack.c.h.b16 %v31
  %v159 = vunpack.c.l.b16 %v32
  %v160 = vunpack.c.h.b16 %v32
  %v161 = vunpack.c.l.b16 %v33
  %v162 = vunpack.c.h.b16 %v33
  %v163 = vunpack.c.l.b16 %v34
  %v164 = vunpack.c.h.b16 %v34
  %v165 = vunpack.c.l.b16 %v35
  %v166 = vunpack.c.h.b16 %v35
  %v167 = vunpack.c.l.b16 %v36
  %v168 = vunpack.c.h.b16 %v36
  %v169 = vunpack.c.l.b16 %v37
  %v170 = vunpack.c.h.b16 %v37
  %v171 = vunpack.c.l.b16 %v38
  %v172 = vunpack.c.h.b16 %v38
  %v173 = vunpack.c.l.b16 %v39
  %v174 = vunpack.c.h.b16 %v39
  %v175 = vunpack.c.l.b16 %v40
  %v176 = vunpack.c.h.b16 %v40
  %v177 = vunpack.c.l.b16 %v41
  %v178 = vunpack.c.h.b16 %v41
  %v179 = vunpack.c.l.b16 %v42
  %v180 = vunpack.c.h.b16 %v42
  %v181 = vunpack.c.l.b16 %v43
  %v182 = vunpack.c.h.b16 %v43
  %v183 = vunpack.c.l.b16 %v44
  %v184 = vunpack.c.h.b16 %v44
  %v185 = vunpack.c.l.b16 %v45
  %v186 = vunpack.c.h.b16 %v45
  %v187 = vunpack.c.l.b16 %v46
  %v188 = vunpack.c.h.b16 %v46
  %v189 = vunpack.c.l.b16 %v47
  %v190 = vunpack.c.h.b16 %v47
  %v191 = vunpack.c.l.b16 %v48
  %v192 = vunpack.c.h.b16 %v48
  %v193 = vunpack.c.l.b16 %v49
  %v194 = vunpack.c.h.b16 %v49
  %v195 = vunpack.c.l.b16 %v50
  %v196 = vunpack.c.h.b16 %v50
  %v197 = vunpack.c.l.b16 %v51
  %v198 = vunpack.c.h.b16 %v51
  %v199 = vpack.c.b16 %v139, %v135
  %v200 = vpack.c.b16 %v140, %v136
  %v201 = vpack.c.b16 %v141, %v137
  %v202 = vpack.c.b16 %v142, %v138
  %v203 = vpack.c.b16 %v147, %v143
  %v204 = vpack.c.b16 %v148, %v144
  %v205 = vpack.c.b16 %v149, %v145
  %v206 = vpack.c.b16 %v150, %v146
  %v207 = vpack.c.b16 %v155, %v151
  %v208 = vpack.c.b16 %v156, %v152
  %v209 = vpack.c.b16 %v157, %v153
  %v210 = vpack.c.b16 %v158, %v154
  %v211 = vpack.c.b16 %v163, %v159
  %v212 = vpack.c.b16 %v164, %v160
  %v213 = vpack.c.b16 %v165, %v161
  %v214 = vpack.c.b16 %v166, %v162
  %v215 = vpack.c.b16 %v171, %v167
  %v216 = vpack.c.b16 %v172, %v168
  %v217 = vpack.c.b16 %v173, %v169
  %v218 = vpack.c.b16 %v174, %v170
  %v219 = vpack.c.b16 %v179, %v175
  %v220 = vpack.c.b16 %v180, %v176
  %v221 = vpack.c.b16 %v181, %v177
  %v222 = vpack.c.b16 %v182, %v178
  %v223 = vpack.c.b16 %v187, %v183
  %v224 = vpack.c.b16 %v188, %v184
  %v225 = vpack.c.b16 %v189, %v185
  %v226 = vpack.c.b16 %v190, %v186
  %v227 = vpack.c.b16 %v195, %v191
  %v228 = vpack.c.b16 %v196, %v192
  %v229 = vpack.c.b16 %v197, %v193
  %v230 = vpack.c.b16 %v198, %v194
  %263 = vmatpush.bf16.msra.mxu0 %v227
  %264 = vmatpush.bf16.msra.mxu0 %v223
  %265 = vmatpush.bf16.msra.mxu0 %v219
  %266 = vmatpush.bf16.msra.mxu0 %v215
  %267 = vmatpush.bf16.msra.mxu0 %v211
  %268 = vmatpush.bf16.msra.mxu0 %v207
  %269 = vmatpush.bf16.msra.mxu0 %v203
  %270 = vmatpush.bf16.msra.mxu0 %v199
  %271 = vmatmul.bf16.gmra.mxu0 %v102
  %v272 = vpop.f32.mrf.mxu0
  %v273 = vadd.f32 0.0, %v272
  %v274 = vpop.f32.mrf.mxu0
  %275 = vdwg.mxu0
  %276 = vmatpush.bf16.msra.mxu0 %v228
  %277 = vmatpush.bf16.msra.mxu0 %v224
  %278 = vmatpush.bf16.msra.mxu0 %v220
  %279 = vmatpush.bf16.msra.mxu0 %v216
  %280 = vmatpush.bf16.msra.mxu0 %v212
  %281 = vmatpush.bf16.msra.mxu0 %v208
  %282 = vmatpush.bf16.msra.mxu0 %v204
  %283 = vmatpush.bf16.msra.mxu0 %v200
  %284 = vmatmul.bf16.gmra.mxu0 %v102
  %v285 = vpop.f32.mrf.mxu0
  %v286 = vadd.f32 0.0, %v285
  %v287 = vpop.f32.mrf.mxu0
  %288 = vdwg.mxu0
  %289 = vmatpush.bf16.msra.mxu0 %v229
  %290 = vmatpush.bf16.msra.mxu0 %v225
  %291 = vmatpush.bf16.msra.mxu0 %v221
  %292 = vmatpush.bf16.msra.mxu0 %v217
  %293 = vmatpush.bf16.msra.mxu0 %v213
  %294 = vmatpush.bf16.msra.mxu0 %v209
  %295 = vmatpush.bf16.msra.mxu0 %v205
  %296 = vmatpush.bf16.msra.mxu0 %v201
  %297 = vmatmul.bf16.gmra.mxu0 %v102
  %v298 = vpop.f32.mrf.mxu0
  %v299 = vadd.f32 0.0, %v298
  %v300 = vpop.f32.mrf.mxu0
  %301 = vdwg.mxu0
  %302 = vmatpush.bf16.msra.mxu0 %v230
  %303 = vmatpush.bf16.msra.mxu0 %v226
  %304 = vmatpush.bf16.msra.mxu0 %v222
  %305 = vmatpush.bf16.msra.mxu0 %v218
  %306 = vmatpush.bf16.msra.mxu0 %v214
  %307 = vmatpush.bf16.msra.mxu0 %v210
  %308 = vmatpush.bf16.msra.mxu0 %v206
  %309 = vmatpush.bf16.msra.mxu0 %v202
  %310 = vmatmul.bf16.gmra.mxu0 %v102
  %v311 = vpop.f32.mrf.mxu0
  %v312 = vadd.f32 0.0, %v311
  %v313 = vpop.f32.mrf.mxu0
  %314 = vdwg.mxu0
  %v319 = vrot.slane %v273, 1
  %v320 = vrot.slane %v286, 1
  %v321 = vrot.slane %v299, 1
  %v322 = vrot.slane %v312, 1
  %v323 = vrot.slane %v273, 2
  %v324 = vrot.slane %v286, 2
  %v325 = vrot.slane %v299, 2
  %v326 = vrot.slane %v312, 2
  %v327 = vrot.slane %v273, 3
  %v328 = vrot.slane %v286, 3
  %v329 = vrot.slane %v299, 3
  %v330 = vrot.slane %v312, 3
  %v331 = vrot.slane %v273, 4
  %v332 = vrot.slane %v286, 4
  %v333 = vrot.slane %v299, 4
  %v334 = vrot.slane %v312, 4
  %v335 = vrot.slane %v273, 5
  %v336 = vrot.slane %v286, 5
  %v337 = vrot.slane %v299, 5
  %v338 = vrot.slane %v312, 5
  %v339 = vrot.slane %v273, 6
  %v340 = vrot.slane %v286, 6
  %v341 = vrot.slane %v299, 6
  %v342 = vrot.slane %v312, 6
  %v343 = vrot.slane %v273, 7
  %v344 = vrot.slane %v286, 7
  %v345 = vrot.slane %v299, 7
  %v346 = vrot.slane %v312, 7
  %v379 = vadd.f32 %v68, %v273
  %v380 = vadd.f32 %v69, %v286
  %v381 = vadd.f32 %v70, %v299
  %v382 = vadd.f32 %v71, %v312
  %v383 = vadd.f32 %v72, %v319
  %v384 = vadd.f32 %v73, %v320
  %v385 = vadd.f32 %v74, %v321
  %v386 = vadd.f32 %v75, %v322
  %v387 = vadd.f32 %v76, %v323
  %v388 = vadd.f32 %v77, %v324
  %v389 = vadd.f32 %v78, %v325
  %v390 = vadd.f32 %v79, %v326
  %v391 = vadd.f32 %v80, %v327
  %v392 = vadd.f32 %v81, %v328
  %v393 = vadd.f32 %v82, %v329
  %v394 = vadd.f32 %v83, %v330
  %v395 = vadd.f32 %v84, %v331
  %v396 = vadd.f32 %v85, %v332
  %v397 = vadd.f32 %v86, %v333
  %v398 = vadd.f32 %v87, %v334
  %v399 = vadd.f32 %v88, %v335
  %v400 = vadd.f32 %v89, %v336
  %v401 = vadd.f32 %v90, %v337
  %v402 = vadd.f32 %v91, %v338
  %v403 = vadd.f32 %v92, %v339
  %v404 = vadd.f32 %v93, %v340
  %v405 = vadd.f32 %v94, %v341
  %v406 = vadd.f32 %v95, %v342
  %v407 = vadd.f32 %v96, %v343
  %v408 = vadd.f32 %v97, %v344
  %v409 = vadd.f32 %v98, %v345
  %v410 = vadd.f32 %v99, %v346
  %v411 = vmul.f32 %v379, 0.5
  %v412 = vmul.f32 %v380, 0.5
  %v413 = vmul.f32 %v381, 0.5
  %v414 = vmul.f32 %v383, 0.5
  %v415 = vmul.f32 %v384, 0.5
  %v416 = vmul.f32 %v385, 0.5
  %v417 = vmul.f32 %v387, 0.5
  %v418 = vmul.f32 %v388, 0.5
  %v419 = vmul.f32 %v389, 0.5
  %v420 = vmul.f32 %v391, 0.5
  %v421 = vmul.f32 %v392, 0.5
  %v422 = vmul.f32 %v393, 0.5
  %v423 = vmul.f32 %v395, 0.5
  %v424 = vmul.f32 %v396, 0.5
  %v425 = vmul.f32 %v397, 0.5
  %v426 = vmul.f32 %v399, 0.5
  %v427 = vmul.f32 %v400, 0.5
  %v428 = vmul.f32 %v401, 0.5
  %v429 = vmul.f32 %v403, 0.5
  %v430 = vmul.f32 %v404, 0.5
  %v431 = vmul.f32 %v405, 0.5
  %v432 = vmul.f32 %v407, 0.5
  %v433 = vmul.f32 %v408, 0.5
  %v434 = vmul.f32 %v409, 0.5
  %v435 = vtanh.pop %v411
  %v436 = vtanh.pop %v412
  %v437 = vtanh.pop %v413
  %v438 = vtanh.pop %v414
  %v439 = vtanh.pop %v415
  %v440 = vtanh.pop %v416
  %v441 = vtanh.pop %v417
  %v442 = vtanh.pop %v418
  %v443 = vtanh.pop %v419
  %v444 = vtanh.pop %v420
  %v445 = vtanh.pop %v421
  %v446 = vtanh.pop %v422
  %v447 = vtanh.pop %v423
  %v448 = vtanh.pop %v424
  %v449 = vtanh.pop %v425
  %v450 = vtanh.pop %v426
  %v451 = vtanh.pop %v427
  %v452 = vtanh.pop %v428
  %v453 = vtanh.pop %v429
  %v454 = vtanh.pop %v430
  %v455 = vtanh.pop %v431
  %v456 = vtanh.pop %v432
  %v457 = vtanh.pop %v433
  %v458 = vtanh.pop %v434
  %v459 = vadd.f32 %v435, 1.0
  %v460 = vadd.f32 %v436, 1.0
  %v461 = vadd.f32 %v437, 1.0
  %v462 = vadd.f32 %v438, 1.0
  %v463 = vadd.f32 %v439, 1.0
  %v464 = vadd.f32 %v440, 1.0
  %v465 = vadd.f32 %v441, 1.0
  %v466 = vadd.f32 %v442, 1.0
  %v467 = vadd.f32 %v443, 1.0
  %v468 = vadd.f32 %v444, 1.0
  %v469 = vadd.f32 %v445, 1.0
  %v470 = vadd.f32 %v446, 1.0
  %v471 = vadd.f32 %v447, 1.0
  %v472 = vadd.f32 %v448, 1.0
  %v473 = vadd.f32 %v449, 1.0
  %v474 = vadd.f32 %v450, 1.0
  %v475 = vadd.f32 %v451, 1.0
  %v476 = vadd.f32 %v452, 1.0
  %v477 = vadd.f32 %v453, 1.0
  %v478 = vadd.f32 %v454, 1.0
  %v479 = vadd.f32 %v455, 1.0
  %v480 = vadd.f32 %v456, 1.0
  %v481 = vadd.f32 %v457, 1.0
  %v482 = vadd.f32 %v458, 1.0
  %v483 = vmul.f32 %v459, 0.5
  %v484 = vmul.f32 %v460, 0.5
  %v485 = vmul.f32 %v461, 0.5
  %v486 = vmul.f32 %v462, 0.5
  %v487 = vmul.f32 %v463, 0.5
  %v488 = vmul.f32 %v464, 0.5
  %v489 = vmul.f32 %v465, 0.5
  %v490 = vmul.f32 %v466, 0.5
  %v491 = vmul.f32 %v467, 0.5
  %v492 = vmul.f32 %v468, 0.5
  %v493 = vmul.f32 %v469, 0.5
  %v494 = vmul.f32 %v470, 0.5
  %v495 = vmul.f32 %v471, 0.5
  %v496 = vmul.f32 %v472, 0.5
  %v497 = vmul.f32 %v473, 0.5
  %v498 = vmul.f32 %v474, 0.5
  %v499 = vmul.f32 %v475, 0.5
  %v500 = vmul.f32 %v476, 0.5
  %v501 = vmul.f32 %v477, 0.5
  %v502 = vmul.f32 %v478, 0.5
  %v503 = vmul.f32 %v479, 0.5
  %v504 = vmul.f32 %v480, 0.5
  %v505 = vmul.f32 %v481, 0.5
  %v506 = vmul.f32 %v482, 0.5
  %v507 = vtanh.pop %v382
  %v508 = vtanh.pop %v386
  %v509 = vtanh.pop %v390
  %v510 = vtanh.pop %v394
  %v511 = vtanh.pop %v398
  %v512 = vtanh.pop %v402
  %v513 = vtanh.pop %v406
  %v514 = vtanh.pop %v410
  %v516 = vrot.slane %v101, 1
  %v517 = vrot.slane %v101, 2
  %v518 = vrot.slane %v101, 3
  %v519 = vrot.slane %v101, 4
  %v520 = vrot.slane %v101, 5
  %v521 = vrot.slane %v101, 6
  %v522 = vrot.slane %v101, 7
  %v531 = vmul.f32 %v484, %v101
  %v532 = vmul.f32 %v487, %v516
  %v533 = vmul.f32 %v490, %v517
  %v534 = vmul.f32 %v493, %v518
  %v535 = vmul.f32 %v496, %v519
  %v536 = vmul.f32 %v499, %v520
  %v537 = vmul.f32 %v502, %v521
  %v538 = vmul.f32 %v505, %v522
  %v539 = vmul.f32 %v483, %v507
  %v540 = vmul.f32 %v486, %v508
  %v541 = vmul.f32 %v489, %v509
  %v542 = vmul.f32 %v492, %v510
  %v543 = vmul.f32 %v495, %v511
  %v544 = vmul.f32 %v498, %v512
  %v545 = vmul.f32 %v501, %v513
  %v546 = vmul.f32 %v504, %v514
  %v547 = vadd.f32 %v531, %v539
  %v548 = vadd.f32 %v532, %v540
  %v549 = vadd.f32 %v533, %v541
  %v550 = vadd.f32 %v534, %v542
  %v551 = vadd.f32 %v535, %v543
  %v552 = vadd.f32 %v536, %v544
  %v553 = vadd.f32 %v537, %v545
  %v554 = vadd.f32 %v538, %v546
  %v555 = vtanh.pop %v547
  %v556 = vtanh.pop %v548
  %v557 = vtanh.pop %v549
  %v558 = vtanh.pop %v550
  %v559 = vtanh.pop %v551
  %v560 = vtanh.pop %v552
  %v561 = vtanh.pop %v553
  %v562 = vtanh.pop %v554
  %v563 = vmul.f32 %v485, %v555
  %v564 = vmul.f32 %v488, %v556
  %v565 = vmul.f32 %v491, %v557
  %v566 = vmul.f32 %v494, %v558
  %v567 = vmul.f32 %v497, %v559
  %v568 = vmul.f32 %v500, %v560
  %v569 = vmul.f32 %v503, %v561
  %v570 = vmul.f32 %v506, %v562
  %v571 = vpack.c.bf16 %v563, %v563
  %v572 = vpack.c.bf16 %v564, %v564
  %v573 = vpack.c.bf16 %v565, %v565
  %v574 = vpack.c.bf16 %v566, %v566
  %v575 = vpack.c.bf16 %v567, %v567
  %v576 = vpack.c.bf16 %v568, %v568
  %v577 = vpack.c.bf16 %v569, %v569
  %v578 = vpack.c.bf16 %v570, %v570
  %v587 = vunpack.c.l.b16 %v571
  %v588 = vunpack.c.l.b16 %v572
  %v589 = vunpack.c.l.b16 %v573
  %v590 = vunpack.c.l.b16 %v574
  %v591 = vunpack.c.l.b16 %v575
  %v592 = vunpack.c.l.b16 %v576
  %v593 = vunpack.c.l.b16 %v577
  %v594 = vunpack.c.l.b16 %v578
  %v595 = vrot.slane %v588, 7
  %vm596 = vcmask 1041409
  %v597 = vsel %vm596, %v595, %v587
  %v598 = vrot.slane %v589, 6
  %vm599 = vcmask 1042434
  %v600 = vsel %vm599, %v598, %v597
  %v601 = vrot.slane %v590, 5
  %vm602 = vcmask 1043459
  %v603 = vsel %vm602, %v601, %v600
  %v604 = vrot.slane %v591, 4
  %vm605 = vcmask 1044484
  %v606 = vsel %vm605, %v604, %v603
  %v607 = vrot.slane %v592, 3
  %vm608 = vcmask 1045509
  %v609 = vsel %vm608, %v607, %v606
  %v610 = vrot.slane %v593, 2
  %vm611 = vcmask 1046534
  %v612 = vsel %vm611, %v610, %v609
  %v613 = vrot.slane %v594, 1
  %vm614 = vcmask 1047559
  %v615 = vsel %vm614, %v613, %v612
  %v616 = vpack.c.b16 %v615, %v615
  %618 = vmatpush.bf16.msra.mxu0 %v227
  %619 = vmatpush.bf16.msra.mxu0 %v223
  %620 = vmatpush.bf16.msra.mxu0 %v219
  %621 = vmatpush.bf16.msra.mxu0 %v215
  %622 = vmatpush.bf16.msra.mxu0 %v211
  %623 = vmatpush.bf16.msra.mxu0 %v207
  %624 = vmatpush.bf16.msra.mxu0 %v203
  %625 = vmatpush.bf16.msra.mxu0 %v199
  %626 = vmatmul.bf16.gmra.mxu0 %v616
  %v627 = vpop.f32.mrf.mxu0
  %v628 = vadd.f32 0.0, %v627
  %v629 = vpop.f32.mrf.mxu0
  %630 = vdwg.mxu0
  %631 = vmatpush.bf16.msra.mxu0 %v228
  %632 = vmatpush.bf16.msra.mxu0 %v224
  %633 = vmatpush.bf16.msra.mxu0 %v220
  %634 = vmatpush.bf16.msra.mxu0 %v216
  %635 = vmatpush.bf16.msra.mxu0 %v212
  %636 = vmatpush.bf16.msra.mxu0 %v208
  %637 = vmatpush.bf16.msra.mxu0 %v204
  %638 = vmatpush.bf16.msra.mxu0 %v200
  %639 = vmatmul.bf16.gmra.mxu0 %v616
  %v640 = vpop.f32.mrf.mxu0
  %v641 = vadd.f32 0.0, %v640
  %v642 = vpop.f32.mrf.mxu0
  %643 = vdwg.mxu0
  %644 = vmatpush.bf16.msra.mxu0 %v229
  %645 = vmatpush.bf16.msra.mxu0 %v225
  %646 = vmatpush.bf16.msra.mxu0 %v221
  %647 = vmatpush.bf16.msra.mxu0 %v217
  %648 = vmatpush.bf16.msra.mxu0 %v213
  %649 = vmatpush.bf16.msra.mxu0 %v209
  %650 = vmatpush.bf16.msra.mxu0 %v205
  %651 = vmatpush.bf16.msra.mxu0 %v201
  %652 = vmatmul.bf16.gmra.mxu0 %v616
  %v653 = vpop.f32.mrf.mxu0
  %v654 = vadd.f32 0.0, %v653
  %v655 = vpop.f32.mrf.mxu0
  %656 = vdwg.mxu0
  %657 = vmatpush.bf16.msra.mxu0 %v230
  %658 = vmatpush.bf16.msra.mxu0 %v226
  %659 = vmatpush.bf16.msra.mxu0 %v222
  %660 = vmatpush.bf16.msra.mxu0 %v218
  %661 = vmatpush.bf16.msra.mxu0 %v214
  %662 = vmatpush.bf16.msra.mxu0 %v210
  %663 = vmatpush.bf16.msra.mxu0 %v206
  %664 = vmatpush.bf16.msra.mxu0 %v202
  %665 = vmatmul.bf16.gmra.mxu0 %v616
  %v666 = vpop.f32.mrf.mxu0
  %v667 = vadd.f32 0.0, %v666
  %v668 = vpop.f32.mrf.mxu0
  %669 = vdwg.mxu0
  %v674 = vrot.slane %v628, 7
  %v675 = vrot.slane %v641, 7
  %v676 = vrot.slane %v654, 7
  %v677 = vrot.slane %v667, 7
  %v678 = vrot.slane %v628, 1
  %v679 = vrot.slane %v641, 1
  %v680 = vrot.slane %v654, 1
  %v681 = vrot.slane %v667, 1
  %v682 = vrot.slane %v628, 2
  %v683 = vrot.slane %v641, 2
  %v684 = vrot.slane %v654, 2
  %v685 = vrot.slane %v667, 2
  %v686 = vrot.slane %v628, 3
  %v687 = vrot.slane %v641, 3
  %v688 = vrot.slane %v654, 3
  %v689 = vrot.slane %v667, 3
  %v690 = vrot.slane %v628, 4
  %v691 = vrot.slane %v641, 4
  %v692 = vrot.slane %v654, 4
  %v693 = vrot.slane %v667, 4
  %v694 = vrot.slane %v628, 5
  %v695 = vrot.slane %v641, 5
  %v696 = vrot.slane %v654, 5
  %v697 = vrot.slane %v667, 5
  %v698 = vrot.slane %v628, 6
  %v699 = vrot.slane %v641, 6
  %v700 = vrot.slane %v654, 6
  %v701 = vrot.slane %v667, 6
  %v734 = vadd.f32 %v68, %v674
  %v735 = vadd.f32 %v69, %v675
  %v736 = vadd.f32 %v70, %v676
  %v737 = vadd.f32 %v71, %v677
  %v738 = vadd.f32 %v72, %v628
  %v739 = vadd.f32 %v73, %v641
  %v740 = vadd.f32 %v74, %v654
  %v741 = vadd.f32 %v75, %v667
  %v742 = vadd.f32 %v76, %v678
  %v743 = vadd.f32 %v77, %v679
  %v744 = vadd.f32 %v78, %v680
  %v745 = vadd.f32 %v79, %v681
  %v746 = vadd.f32 %v80, %v682
  %v747 = vadd.f32 %v81, %v683
  %v748 = vadd.f32 %v82, %v684
  %v749 = vadd.f32 %v83, %v685
  %v750 = vadd.f32 %v84, %v686
  %v751 = vadd.f32 %v85, %v687
  %v752 = vadd.f32 %v86, %v688
  %v753 = vadd.f32 %v87, %v689
  %v754 = vadd.f32 %v88, %v690
  %v755 = vadd.f32 %v89, %v691
  %v756 = vadd.f32 %v90, %v692
  %v757 = vadd.f32 %v91, %v693
  %v758 = vadd.f32 %v92, %v694
  %v759 = vadd.f32 %v93, %v695
  %v760 = vadd.f32 %v94, %v696
  %v761 = vadd.f32 %v95, %v697
  %v762 = vadd.f32 %v96, %v698
  %v763 = vadd.f32 %v97, %v699
  %v764 = vadd.f32 %v98, %v700
  %v765 = vadd.f32 %v99, %v701
  %v766 = vmul.f32 %v734, 0.5
  %v767 = vmul.f32 %v735, 0.5
  %v768 = vmul.f32 %v736, 0.5
  %v769 = vmul.f32 %v738, 0.5
  %v770 = vmul.f32 %v739, 0.5
  %v771 = vmul.f32 %v740, 0.5
  %v772 = vmul.f32 %v742, 0.5
  %v773 = vmul.f32 %v743, 0.5
  %v774 = vmul.f32 %v744, 0.5
  %v775 = vmul.f32 %v746, 0.5
  %v776 = vmul.f32 %v747, 0.5
  %v777 = vmul.f32 %v748, 0.5
  %v778 = vmul.f32 %v750, 0.5
  %v779 = vmul.f32 %v751, 0.5
  %v780 = vmul.f32 %v752, 0.5
  %v781 = vmul.f32 %v754, 0.5
  %v782 = vmul.f32 %v755, 0.5
  %v783 = vmul.f32 %v756, 0.5
  %v784 = vmul.f32 %v758, 0.5
  %v785 = vmul.f32 %v759, 0.5
  %v786 = vmul.f32 %v760, 0.5
  %v787 = vmul.f32 %v762, 0.5
  %v788 = vmul.f32 %v763, 0.5
  %v789 = vmul.f32 %v764, 0.5
  %v790 = vtanh.pop %v766
  %v791 = vtanh.pop %v767
  %v792 = vtanh.pop %v768
  %v793 = vtanh.pop %v769
  %v794 = vtanh.pop %v770
  %v795 = vtanh.pop %v771
  %v796 = vtanh.pop %v772
  %v797 = vtanh.pop %v773
  %v798 = vtanh.pop %v774
  %v799 = vtanh.pop %v775
  %v800 = vtanh.pop %v776
  %v801 = vtanh.pop %v777
  %v802 = vtanh.pop %v778
  %v803 = vtanh.pop %v779
  %v804 = vtanh.pop %v780
  %v805 = vtanh.pop %v781
  %v806 = vtanh.pop %v782
  %v807 = vtanh.pop %v783
  %v808 = vtanh.pop %v784
  %v809 = vtanh.pop %v785
  %v810 = vtanh.pop %v786
  %v811 = vtanh.pop %v787
  %v812 = vtanh.pop %v788
  %v813 = vtanh.pop %v789
  %v814 = vadd.f32 %v790, 1.0
  %v815 = vadd.f32 %v791, 1.0
  %v816 = vadd.f32 %v792, 1.0
  %v817 = vadd.f32 %v793, 1.0
  %v818 = vadd.f32 %v794, 1.0
  %v819 = vadd.f32 %v795, 1.0
  %v820 = vadd.f32 %v796, 1.0
  %v821 = vadd.f32 %v797, 1.0
  %v822 = vadd.f32 %v798, 1.0
  %v823 = vadd.f32 %v799, 1.0
  %v824 = vadd.f32 %v800, 1.0
  %v825 = vadd.f32 %v801, 1.0
  %v826 = vadd.f32 %v802, 1.0
  %v827 = vadd.f32 %v803, 1.0
  %v828 = vadd.f32 %v804, 1.0
  %v829 = vadd.f32 %v805, 1.0
  %v830 = vadd.f32 %v806, 1.0
  %v831 = vadd.f32 %v807, 1.0
  %v832 = vadd.f32 %v808, 1.0
  %v833 = vadd.f32 %v809, 1.0
  %v834 = vadd.f32 %v810, 1.0
  %v835 = vadd.f32 %v811, 1.0
  %v836 = vadd.f32 %v812, 1.0
  %v837 = vadd.f32 %v813, 1.0
  %v838 = vmul.f32 %v814, 0.5
  %v839 = vmul.f32 %v815, 0.5
  %v840 = vmul.f32 %v816, 0.5
  %v841 = vmul.f32 %v817, 0.5
  %v842 = vmul.f32 %v818, 0.5
  %v843 = vmul.f32 %v819, 0.5
  %v844 = vmul.f32 %v820, 0.5
  %v845 = vmul.f32 %v821, 0.5
  %v846 = vmul.f32 %v822, 0.5
  %v847 = vmul.f32 %v823, 0.5
  %v848 = vmul.f32 %v824, 0.5
  %v849 = vmul.f32 %v825, 0.5
  %v850 = vmul.f32 %v826, 0.5
  %v851 = vmul.f32 %v827, 0.5
  %v852 = vmul.f32 %v828, 0.5
  %v853 = vmul.f32 %v829, 0.5
  %v854 = vmul.f32 %v830, 0.5
  %v855 = vmul.f32 %v831, 0.5
  %v856 = vmul.f32 %v832, 0.5
  %v857 = vmul.f32 %v833, 0.5
  %v858 = vmul.f32 %v834, 0.5
  %v859 = vmul.f32 %v835, 0.5
  %v860 = vmul.f32 %v836, 0.5
  %v861 = vmul.f32 %v837, 0.5
  %v862 = vtanh.pop %v737
  %v863 = vtanh.pop %v741
  %v864 = vtanh.pop %v745
  %v865 = vtanh.pop %v749
  %v866 = vtanh.pop %v753
  %v867 = vtanh.pop %v757
  %v868 = vtanh.pop %v761
  %v869 = vtanh.pop %v765
  %v878 = vrot.slane %v547, 7
  %v879 = vrot.slane %v548, 7
  %v880 = vrot.slane %v549, 7
  %v881 = vrot.slane %v550, 7
  %v882 = vrot.slane %v551, 7
  %v883 = vrot.slane %v552, 7
  %v884 = vrot.slane %v553, 7
  %v885 = vrot.slane %v554, 7
  %v894 = vmul.f32 %v839, %v878
  %v895 = vmul.f32 %v842, %v879
  %v896 = vmul.f32 %v845, %v880
  %v897 = vmul.f32 %v848, %v881
  %v898 = vmul.f32 %v851, %v882
  %v899 = vmul.f32 %v854, %v883
  %v900 = vmul.f32 %v857, %v884
  %v901 = vmul.f32 %v860, %v885
  %v902 = vmul.f32 %v838, %v862
  %v903 = vmul.f32 %v841, %v863
  %v904 = vmul.f32 %v844, %v864
  %v905 = vmul.f32 %v847, %v865
  %v906 = vmul.f32 %v850, %v866
  %v907 = vmul.f32 %v853, %v867
  %v908 = vmul.f32 %v856, %v868
  %v909 = vmul.f32 %v859, %v869
  %v910 = vadd.f32 %v894, %v902
  %v911 = vadd.f32 %v895, %v903
  %v912 = vadd.f32 %v896, %v904
  %v913 = vadd.f32 %v897, %v905
  %v914 = vadd.f32 %v898, %v906
  %v915 = vadd.f32 %v899, %v907
  %v916 = vadd.f32 %v900, %v908
  %v917 = vadd.f32 %v901, %v909
  %v918 = vtanh.pop %v910
  %v919 = vtanh.pop %v911
  %v920 = vtanh.pop %v912
  %v921 = vtanh.pop %v913
  %v922 = vtanh.pop %v914
  %v923 = vtanh.pop %v915
  %v924 = vtanh.pop %v916
  %v925 = vtanh.pop %v917
  %v926 = vmul.f32 %v840, %v918
  %v927 = vmul.f32 %v843, %v919
  %v928 = vmul.f32 %v846, %v920
  %v929 = vmul.f32 %v849, %v921
  %v930 = vmul.f32 %v852, %v922
  %v931 = vmul.f32 %v855, %v923
  %v932 = vmul.f32 %v858, %v924
  %v933 = vmul.f32 %v861, %v925
  %v934 = vpack.c.bf16 %v926, %v926
  %v935 = vpack.c.bf16 %v927, %v927
  %v936 = vpack.c.bf16 %v928, %v928
  %v937 = vpack.c.bf16 %v929, %v929
  %v938 = vpack.c.bf16 %v930, %v930
  %v939 = vpack.c.bf16 %v931, %v931
  %v940 = vpack.c.bf16 %v932, %v932
  %v941 = vpack.c.bf16 %v933, %v933
  %v950 = vunpack.c.l.b16 %v934
  %v951 = vunpack.c.l.b16 %v935
  %v952 = vunpack.c.l.b16 %v936
  %v953 = vunpack.c.l.b16 %v937
  %v954 = vunpack.c.l.b16 %v938
  %v955 = vunpack.c.l.b16 %v939
  %v956 = vunpack.c.l.b16 %v940
  %v957 = vunpack.c.l.b16 %v941
  %v958 = vrot.slane %v950, 1
  %v959 = vsel %vm596, %v951, %v958
  %v960 = vrot.slane %v952, 7
  %v961 = vsel %vm599, %v960, %v959
  %v962 = vrot.slane %v953, 6
  %v963 = vsel %vm602, %v962, %v961
  %v964 = vrot.slane %v954, 5
  %v965 = vsel %vm605, %v964, %v963
  %v966 = vrot.slane %v955, 4
  %v967 = vsel %vm608, %v966, %v965
  %v968 = vrot.slane %v956, 3
  %v969 = vsel %vm611, %v968, %v967
  %v970 = vrot.slane %v957, 2
  %v971 = vsel %vm614, %v970, %v969
  %v972 = vpack.c.b16 %v971, %v971
  %974 = vmatpush.bf16.msra.mxu0 %v227
  %975 = vmatpush.bf16.msra.mxu0 %v223
  %976 = vmatpush.bf16.msra.mxu0 %v219
  %977 = vmatpush.bf16.msra.mxu0 %v215
  %978 = vmatpush.bf16.msra.mxu0 %v211
  %979 = vmatpush.bf16.msra.mxu0 %v207
  %980 = vmatpush.bf16.msra.mxu0 %v203
  %981 = vmatpush.bf16.msra.mxu0 %v199
  %982 = vmatmul.bf16.gmra.mxu0 %v972
  %v983 = vpop.f32.mrf.mxu0
  %v984 = vadd.f32 0.0, %v983
  %v985 = vpop.f32.mrf.mxu0
  %986 = vdwg.mxu0
  %987 = vmatpush.bf16.msra.mxu0 %v228
  %988 = vmatpush.bf16.msra.mxu0 %v224
  %989 = vmatpush.bf16.msra.mxu0 %v220
  %990 = vmatpush.bf16.msra.mxu0 %v216
  %991 = vmatpush.bf16.msra.mxu0 %v212
  %992 = vmatpush.bf16.msra.mxu0 %v208
  %993 = vmatpush.bf16.msra.mxu0 %v204
  %994 = vmatpush.bf16.msra.mxu0 %v200
  %995 = vmatmul.bf16.gmra.mxu0 %v972
  %v996 = vpop.f32.mrf.mxu0
  %v997 = vadd.f32 0.0, %v996
  %v998 = vpop.f32.mrf.mxu0
  %999 = vdwg.mxu0
  %1000 = vmatpush.bf16.msra.mxu0 %v229
  %1001 = vmatpush.bf16.msra.mxu0 %v225
  %1002 = vmatpush.bf16.msra.mxu0 %v221
  %1003 = vmatpush.bf16.msra.mxu0 %v217
  %1004 = vmatpush.bf16.msra.mxu0 %v213
  %1005 = vmatpush.bf16.msra.mxu0 %v209
  %1006 = vmatpush.bf16.msra.mxu0 %v205
  %1007 = vmatpush.bf16.msra.mxu0 %v201
  %1008 = vmatmul.bf16.gmra.mxu0 %v972
  %v1009 = vpop.f32.mrf.mxu0
  %v1010 = vadd.f32 0.0, %v1009
  %v1011 = vpop.f32.mrf.mxu0
  %1012 = vdwg.mxu0
  %1013 = vmatpush.bf16.msra.mxu0 %v230
  %1014 = vmatpush.bf16.msra.mxu0 %v226
  %1015 = vmatpush.bf16.msra.mxu0 %v222
  %1016 = vmatpush.bf16.msra.mxu0 %v218
  %1017 = vmatpush.bf16.msra.mxu0 %v214
  %1018 = vmatpush.bf16.msra.mxu0 %v210
  %1019 = vmatpush.bf16.msra.mxu0 %v206
  %1020 = vmatpush.bf16.msra.mxu0 %v202
  %1021 = vmatmul.bf16.gmra.mxu0 %v972
  %v1022 = vpop.f32.mrf.mxu0
  %v1023 = vadd.f32 0.0, %v1022
  %v1024 = vpop.f32.mrf.mxu0
  %1025 = vdwg.mxu0
  %v1030 = vrot.slane %v984, 6
  %v1031 = vrot.slane %v997, 6
  %v1032 = vrot.slane %v1010, 6
  %v1033 = vrot.slane %v1023, 6
  %v1034 = vrot.slane %v984, 7
  %v1035 = vrot.slane %v997, 7
  %v1036 = vrot.slane %v1010, 7
  %v1037 = vrot.slane %v1023, 7
  %v1038 = vrot.slane %v984, 1
  %v1039 = vrot.slane %v997, 1
  %v1040 = vrot.slane %v1010, 1
  %v1041 = vrot.slane %v1023, 1
  %v1042 = vrot.slane %v984, 2
  %v1043 = vrot.slane %v997, 2
  %v1044 = vrot.slane %v1010, 2
  %v1045 = vrot.slane %v1023, 2
  %v1046 = vrot.slane %v984, 3
  %v1047 = vrot.slane %v997, 3
  %v1048 = vrot.slane %v1010, 3
  %v1049 = vrot.slane %v1023, 3
  %v1050 = vrot.slane %v984, 4
  %v1051 = vrot.slane %v997, 4
  %v1052 = vrot.slane %v1010, 4
  %v1053 = vrot.slane %v1023, 4
  %v1054 = vrot.slane %v984, 5
  %v1055 = vrot.slane %v997, 5
  %v1056 = vrot.slane %v1010, 5
  %v1057 = vrot.slane %v1023, 5
  %v1090 = vadd.f32 %v68, %v1030
  %v1091 = vadd.f32 %v69, %v1031
  %v1092 = vadd.f32 %v70, %v1032
  %v1093 = vadd.f32 %v71, %v1033
  %v1094 = vadd.f32 %v72, %v1034
  %v1095 = vadd.f32 %v73, %v1035
  %v1096 = vadd.f32 %v74, %v1036
  %v1097 = vadd.f32 %v75, %v1037
  %v1098 = vadd.f32 %v76, %v984
  %v1099 = vadd.f32 %v77, %v997
  %v1100 = vadd.f32 %v78, %v1010
  %v1101 = vadd.f32 %v79, %v1023
  %v1102 = vadd.f32 %v80, %v1038
  %v1103 = vadd.f32 %v81, %v1039
  %v1104 = vadd.f32 %v82, %v1040
  %v1105 = vadd.f32 %v83, %v1041
  %v1106 = vadd.f32 %v84, %v1042
  %v1107 = vadd.f32 %v85, %v1043
  %v1108 = vadd.f32 %v86, %v1044
  %v1109 = vadd.f32 %v87, %v1045
  %v1110 = vadd.f32 %v88, %v1046
  %v1111 = vadd.f32 %v89, %v1047
  %v1112 = vadd.f32 %v90, %v1048
  %v1113 = vadd.f32 %v91, %v1049
  %v1114 = vadd.f32 %v92, %v1050
  %v1115 = vadd.f32 %v93, %v1051
  %v1116 = vadd.f32 %v94, %v1052
  %v1117 = vadd.f32 %v95, %v1053
  %v1118 = vadd.f32 %v96, %v1054
  %v1119 = vadd.f32 %v97, %v1055
  %v1120 = vadd.f32 %v98, %v1056
  %v1121 = vadd.f32 %v99, %v1057
  %v1122 = vmul.f32 %v1090, 0.5
  %v1123 = vmul.f32 %v1091, 0.5
  %v1124 = vmul.f32 %v1092, 0.5
  %v1125 = vmul.f32 %v1094, 0.5
  %v1126 = vmul.f32 %v1095, 0.5
  %v1127 = vmul.f32 %v1096, 0.5
  %v1128 = vmul.f32 %v1098, 0.5
  %v1129 = vmul.f32 %v1099, 0.5
  %v1130 = vmul.f32 %v1100, 0.5
  %v1131 = vmul.f32 %v1102, 0.5
  %v1132 = vmul.f32 %v1103, 0.5
  %v1133 = vmul.f32 %v1104, 0.5
  %v1134 = vmul.f32 %v1106, 0.5
  %v1135 = vmul.f32 %v1107, 0.5
  %v1136 = vmul.f32 %v1108, 0.5
  %v1137 = vmul.f32 %v1110, 0.5
  %v1138 = vmul.f32 %v1111, 0.5
  %v1139 = vmul.f32 %v1112, 0.5
  %v1140 = vmul.f32 %v1114, 0.5
  %v1141 = vmul.f32 %v1115, 0.5
  %v1142 = vmul.f32 %v1116, 0.5
  %v1143 = vmul.f32 %v1118, 0.5
  %v1144 = vmul.f32 %v1119, 0.5
  %v1145 = vmul.f32 %v1120, 0.5
  %v1146 = vtanh.pop %v1122
  %v1147 = vtanh.pop %v1123
  %v1148 = vtanh.pop %v1124
  %v1149 = vtanh.pop %v1125
  %v1150 = vtanh.pop %v1126
  %v1151 = vtanh.pop %v1127
  %v1152 = vtanh.pop %v1128
  %v1153 = vtanh.pop %v1129
  %v1154 = vtanh.pop %v1130
  %v1155 = vtanh.pop %v1131
  %v1156 = vtanh.pop %v1132
  %v1157 = vtanh.pop %v1133
  %v1158 = vtanh.pop %v1134
  %v1159 = vtanh.pop %v1135
  %v1160 = vtanh.pop %v1136
  %v1161 = vtanh.pop %v1137
  %v1162 = vtanh.pop %v1138
  %v1163 = vtanh.pop %v1139
  %v1164 = vtanh.pop %v1140
  %v1165 = vtanh.pop %v1141
  %v1166 = vtanh.pop %v1142
  %v1167 = vtanh.pop %v1143
  %v1168 = vtanh.pop %v1144
  %v1169 = vtanh.pop %v1145
  %v1170 = vadd.f32 %v1146, 1.0
  %v1171 = vadd.f32 %v1147, 1.0
  %v1172 = vadd.f32 %v1148, 1.0
  %v1173 = vadd.f32 %v1149, 1.0
  %v1174 = vadd.f32 %v1150, 1.0
  %v1175 = vadd.f32 %v1151, 1.0
  %v1176 = vadd.f32 %v1152, 1.0
  %v1177 = vadd.f32 %v1153, 1.0
  %v1178 = vadd.f32 %v1154, 1.0
  %v1179 = vadd.f32 %v1155, 1.0
  %v1180 = vadd.f32 %v1156, 1.0
  %v1181 = vadd.f32 %v1157, 1.0
  %v1182 = vadd.f32 %v1158, 1.0
  %v1183 = vadd.f32 %v1159, 1.0
  %v1184 = vadd.f32 %v1160, 1.0
  %v1185 = vadd.f32 %v1161, 1.0
  %v1186 = vadd.f32 %v1162, 1.0
  %v1187 = vadd.f32 %v1163, 1.0
  %v1188 = vadd.f32 %v1164, 1.0
  %v1189 = vadd.f32 %v1165, 1.0
  %v1190 = vadd.f32 %v1166, 1.0
  %v1191 = vadd.f32 %v1167, 1.0
  %v1192 = vadd.f32 %v1168, 1.0
  %v1193 = vadd.f32 %v1169, 1.0
  %v1194 = vmul.f32 %v1170, 0.5
  %v1195 = vmul.f32 %v1171, 0.5
  %v1196 = vmul.f32 %v1172, 0.5
  %v1197 = vmul.f32 %v1173, 0.5
  %v1198 = vmul.f32 %v1174, 0.5
  %v1199 = vmul.f32 %v1175, 0.5
  %v1200 = vmul.f32 %v1176, 0.5
  %v1201 = vmul.f32 %v1177, 0.5
  %v1202 = vmul.f32 %v1178, 0.5
  %v1203 = vmul.f32 %v1179, 0.5
  %v1204 = vmul.f32 %v1180, 0.5
  %v1205 = vmul.f32 %v1181, 0.5
  %v1206 = vmul.f32 %v1182, 0.5
  %v1207 = vmul.f32 %v1183, 0.5
  %v1208 = vmul.f32 %v1184, 0.5
  %v1209 = vmul.f32 %v1185, 0.5
  %v1210 = vmul.f32 %v1186, 0.5
  %v1211 = vmul.f32 %v1187, 0.5
  %v1212 = vmul.f32 %v1188, 0.5
  %v1213 = vmul.f32 %v1189, 0.5
  %v1214 = vmul.f32 %v1190, 0.5
  %v1215 = vmul.f32 %v1191, 0.5
  %v1216 = vmul.f32 %v1192, 0.5
  %v1217 = vmul.f32 %v1193, 0.5
  %v1218 = vtanh.pop %v1093
  %v1219 = vtanh.pop %v1097
  %v1220 = vtanh.pop %v1101
  %v1221 = vtanh.pop %v1105
  %v1222 = vtanh.pop %v1109
  %v1223 = vtanh.pop %v1113
  %v1224 = vtanh.pop %v1117
  %v1225 = vtanh.pop %v1121
  %v1234 = vrot.slane %v910, 7
  %v1235 = vrot.slane %v911, 7
  %v1236 = vrot.slane %v912, 7
  %v1237 = vrot.slane %v913, 7
  %v1238 = vrot.slane %v914, 7
  %v1239 = vrot.slane %v915, 7
  %v1240 = vrot.slane %v916, 7
  %v1241 = vrot.slane %v917, 7
  %v1250 = vmul.f32 %v1195, %v1234
  %v1251 = vmul.f32 %v1198, %v1235
  %v1252 = vmul.f32 %v1201, %v1236
  %v1253 = vmul.f32 %v1204, %v1237
  %v1254 = vmul.f32 %v1207, %v1238
  %v1255 = vmul.f32 %v1210, %v1239
  %v1256 = vmul.f32 %v1213, %v1240
  %v1257 = vmul.f32 %v1216, %v1241
  %v1258 = vmul.f32 %v1194, %v1218
  %v1259 = vmul.f32 %v1197, %v1219
  %v1260 = vmul.f32 %v1200, %v1220
  %v1261 = vmul.f32 %v1203, %v1221
  %v1262 = vmul.f32 %v1206, %v1222
  %v1263 = vmul.f32 %v1209, %v1223
  %v1264 = vmul.f32 %v1212, %v1224
  %v1265 = vmul.f32 %v1215, %v1225
  %v1266 = vadd.f32 %v1250, %v1258
  %v1267 = vadd.f32 %v1251, %v1259
  %v1268 = vadd.f32 %v1252, %v1260
  %v1269 = vadd.f32 %v1253, %v1261
  %v1270 = vadd.f32 %v1254, %v1262
  %v1271 = vadd.f32 %v1255, %v1263
  %v1272 = vadd.f32 %v1256, %v1264
  %v1273 = vadd.f32 %v1257, %v1265
  %v1274 = vtanh.pop %v1266
  %v1275 = vtanh.pop %v1267
  %v1276 = vtanh.pop %v1268
  %v1277 = vtanh.pop %v1269
  %v1278 = vtanh.pop %v1270
  %v1279 = vtanh.pop %v1271
  %v1280 = vtanh.pop %v1272
  %v1281 = vtanh.pop %v1273
  %v1282 = vmul.f32 %v1196, %v1274
  %v1283 = vmul.f32 %v1199, %v1275
  %v1284 = vmul.f32 %v1202, %v1276
  %v1285 = vmul.f32 %v1205, %v1277
  %v1286 = vmul.f32 %v1208, %v1278
  %v1287 = vmul.f32 %v1211, %v1279
  %v1288 = vmul.f32 %v1214, %v1280
  %v1289 = vmul.f32 %v1217, %v1281
  %v1290 = vpack.c.bf16 %v1282, %v1282
  %v1291 = vpack.c.bf16 %v1283, %v1283
  %v1292 = vpack.c.bf16 %v1284, %v1284
  %v1293 = vpack.c.bf16 %v1285, %v1285
  %v1294 = vpack.c.bf16 %v1286, %v1286
  %v1295 = vpack.c.bf16 %v1287, %v1287
  %v1296 = vpack.c.bf16 %v1288, %v1288
  %v1297 = vpack.c.bf16 %v1289, %v1289
  %v1306 = vunpack.c.l.b16 %v1290
  %v1307 = vunpack.c.l.b16 %v1291
  %v1308 = vunpack.c.l.b16 %v1292
  %v1309 = vunpack.c.l.b16 %v1293
  %v1310 = vunpack.c.l.b16 %v1294
  %v1311 = vunpack.c.l.b16 %v1295
  %v1312 = vunpack.c.l.b16 %v1296
  %v1313 = vunpack.c.l.b16 %v1297
  %v1314 = vrot.slane %v1306, 2
  %v1315 = vrot.slane %v1307, 1
  %v1316 = vsel %vm596, %v1315, %v1314
  %v1317 = vsel %vm599, %v1308, %v1316
  %v1318 = vrot.slane %v1309, 7
  %v1319 = vsel %vm602, %v1318, %v1317
  %v1320 = vrot.slane %v1310, 6
  %v1321 = vsel %vm605, %v1320, %v1319
  %v1322 = vrot.slane %v1311, 5
  %v1323 = vsel %vm608, %v1322, %v1321
  %v1324 = vrot.slane %v1312, 4
  %v1325 = vsel %vm611, %v1324, %v1323
  %v1326 = vrot.slane %v1313, 3
  %v1327 = vsel %vm614, %v1326, %v1325
  %v1328 = vpack.c.b16 %v1327, %v1327
  %1330 = vmatpush.bf16.msra.mxu0 %v227
  %1331 = vmatpush.bf16.msra.mxu0 %v223
  %1332 = vmatpush.bf16.msra.mxu0 %v219
  %1333 = vmatpush.bf16.msra.mxu0 %v215
  %1334 = vmatpush.bf16.msra.mxu0 %v211
  %1335 = vmatpush.bf16.msra.mxu0 %v207
  %1336 = vmatpush.bf16.msra.mxu0 %v203
  %1337 = vmatpush.bf16.msra.mxu0 %v199
  %1338 = vmatmul.bf16.gmra.mxu0 %v1328
  %v1339 = vpop.f32.mrf.mxu0
  %v1340 = vadd.f32 0.0, %v1339
  %v1341 = vpop.f32.mrf.mxu0
  %1342 = vdwg.mxu0
  %1343 = vmatpush.bf16.msra.mxu0 %v228
  %1344 = vmatpush.bf16.msra.mxu0 %v224
  %1345 = vmatpush.bf16.msra.mxu0 %v220
  %1346 = vmatpush.bf16.msra.mxu0 %v216
  %1347 = vmatpush.bf16.msra.mxu0 %v212
  %1348 = vmatpush.bf16.msra.mxu0 %v208
  %1349 = vmatpush.bf16.msra.mxu0 %v204
  %1350 = vmatpush.bf16.msra.mxu0 %v200
  %1351 = vmatmul.bf16.gmra.mxu0 %v1328
  %v1352 = vpop.f32.mrf.mxu0
  %v1353 = vadd.f32 0.0, %v1352
  %v1354 = vpop.f32.mrf.mxu0
  %1355 = vdwg.mxu0
  %1356 = vmatpush.bf16.msra.mxu0 %v229
  %1357 = vmatpush.bf16.msra.mxu0 %v225
  %1358 = vmatpush.bf16.msra.mxu0 %v221
  %1359 = vmatpush.bf16.msra.mxu0 %v217
  %1360 = vmatpush.bf16.msra.mxu0 %v213
  %1361 = vmatpush.bf16.msra.mxu0 %v209
  %1362 = vmatpush.bf16.msra.mxu0 %v205
  %1363 = vmatpush.bf16.msra.mxu0 %v201
  %1364 = vmatmul.bf16.gmra.mxu0 %v1328
  %v1365 = vpop.f32.mrf.mxu0
  %v1366 = vadd.f32 0.0, %v1365
  %v1367 = vpop.f32.mrf.mxu0
  %1368 = vdwg.mxu0
  %1369 = vmatpush.bf16.msra.mxu0 %v230
  %1370 = vmatpush.bf16.msra.mxu0 %v226
  %1371 = vmatpush.bf16.msra.mxu0 %v222
  %1372 = vmatpush.bf16.msra.mxu0 %v218
  %1373 = vmatpush.bf16.msra.mxu0 %v214
  %1374 = vmatpush.bf16.msra.mxu0 %v210
  %1375 = vmatpush.bf16.msra.mxu0 %v206
  %1376 = vmatpush.bf16.msra.mxu0 %v202
  %1377 = vmatmul.bf16.gmra.mxu0 %v1328
  %v1378 = vpop.f32.mrf.mxu0
  %v1379 = vadd.f32 0.0, %v1378
  %v1380 = vpop.f32.mrf.mxu0
  %1381 = vdwg.mxu0
  %v1386 = vrot.slane %v1340, 5
  %v1387 = vrot.slane %v1353, 5
  %v1388 = vrot.slane %v1366, 5
  %v1389 = vrot.slane %v1379, 5
  %v1390 = vrot.slane %v1340, 6
  %v1391 = vrot.slane %v1353, 6
  %v1392 = vrot.slane %v1366, 6
  %v1393 = vrot.slane %v1379, 6
  %v1394 = vrot.slane %v1340, 7
  %v1395 = vrot.slane %v1353, 7
  %v1396 = vrot.slane %v1366, 7
  %v1397 = vrot.slane %v1379, 7
  %v1398 = vrot.slane %v1340, 1
  %v1399 = vrot.slane %v1353, 1
  %v1400 = vrot.slane %v1366, 1
  %v1401 = vrot.slane %v1379, 1
  %v1402 = vrot.slane %v1340, 2
  %v1403 = vrot.slane %v1353, 2
  %v1404 = vrot.slane %v1366, 2
  %v1405 = vrot.slane %v1379, 2
  %v1406 = vrot.slane %v1340, 3
  %v1407 = vrot.slane %v1353, 3
  %v1408 = vrot.slane %v1366, 3
  %v1409 = vrot.slane %v1379, 3
  %v1410 = vrot.slane %v1340, 4
  %v1411 = vrot.slane %v1353, 4
  %v1412 = vrot.slane %v1366, 4
  %v1413 = vrot.slane %v1379, 4
  %v1446 = vadd.f32 %v68, %v1386
  %v1447 = vadd.f32 %v69, %v1387
  %v1448 = vadd.f32 %v70, %v1388
  %v1449 = vadd.f32 %v71, %v1389
  %v1450 = vadd.f32 %v72, %v1390
  %v1451 = vadd.f32 %v73, %v1391
  %v1452 = vadd.f32 %v74, %v1392
  %v1453 = vadd.f32 %v75, %v1393
  %v1454 = vadd.f32 %v76, %v1394
  %v1455 = vadd.f32 %v77, %v1395
  %v1456 = vadd.f32 %v78, %v1396
  %v1457 = vadd.f32 %v79, %v1397
  %v1458 = vadd.f32 %v80, %v1340
  %v1459 = vadd.f32 %v81, %v1353
  %v1460 = vadd.f32 %v82, %v1366
  %v1461 = vadd.f32 %v83, %v1379
  %v1462 = vadd.f32 %v84, %v1398
  %v1463 = vadd.f32 %v85, %v1399
  %v1464 = vadd.f32 %v86, %v1400
  %v1465 = vadd.f32 %v87, %v1401
  %v1466 = vadd.f32 %v88, %v1402
  %v1467 = vadd.f32 %v89, %v1403
  %v1468 = vadd.f32 %v90, %v1404
  %v1469 = vadd.f32 %v91, %v1405
  %v1470 = vadd.f32 %v92, %v1406
  %v1471 = vadd.f32 %v93, %v1407
  %v1472 = vadd.f32 %v94, %v1408
  %v1473 = vadd.f32 %v95, %v1409
  %v1474 = vadd.f32 %v96, %v1410
  %v1475 = vadd.f32 %v97, %v1411
  %v1476 = vadd.f32 %v98, %v1412
  %v1477 = vadd.f32 %v99, %v1413
  %v1478 = vmul.f32 %v1446, 0.5
  %v1479 = vmul.f32 %v1447, 0.5
  %v1480 = vmul.f32 %v1448, 0.5
  %v1481 = vmul.f32 %v1450, 0.5
  %v1482 = vmul.f32 %v1451, 0.5
  %v1483 = vmul.f32 %v1452, 0.5
  %v1484 = vmul.f32 %v1454, 0.5
  %v1485 = vmul.f32 %v1455, 0.5
  %v1486 = vmul.f32 %v1456, 0.5
  %v1487 = vmul.f32 %v1458, 0.5
  %v1488 = vmul.f32 %v1459, 0.5
  %v1489 = vmul.f32 %v1460, 0.5
  %v1490 = vmul.f32 %v1462, 0.5
  %v1491 = vmul.f32 %v1463, 0.5
  %v1492 = vmul.f32 %v1464, 0.5
  %v1493 = vmul.f32 %v1466, 0.5
  %v1494 = vmul.f32 %v1467, 0.5
  %v1495 = vmul.f32 %v1468, 0.5
  %v1496 = vmul.f32 %v1470, 0.5
  %v1497 = vmul.f32 %v1471, 0.5
  %v1498 = vmul.f32 %v1472, 0.5
  %v1499 = vmul.f32 %v1474, 0.5
  %v1500 = vmul.f32 %v1475, 0.5
  %v1501 = vmul.f32 %v1476, 0.5
  %v1502 = vtanh.pop %v1478
  %v1503 = vtanh.pop %v1479
  %v1504 = vtanh.pop %v1480
  %v1505 = vtanh.pop %v1481
  %v1506 = vtanh.pop %v1482
  %v1507 = vtanh.pop %v1483
  %v1508 = vtanh.pop %v1484
  %v1509 = vtanh.pop %v1485
  %v1510 = vtanh.pop %v1486
  %v1511 = vtanh.pop %v1487
  %v1512 = vtanh.pop %v1488
  %v1513 = vtanh.pop %v1489
  %v1514 = vtanh.pop %v1490
  %v1515 = vtanh.pop %v1491
  %v1516 = vtanh.pop %v1492
  %v1517 = vtanh.pop %v1493
  %v1518 = vtanh.pop %v1494
  %v1519 = vtanh.pop %v1495
  %v1520 = vtanh.pop %v1496
  %v1521 = vtanh.pop %v1497
  %v1522 = vtanh.pop %v1498
  %v1523 = vtanh.pop %v1499
  %v1524 = vtanh.pop %v1500
  %v1525 = vtanh.pop %v1501
  %v1526 = vadd.f32 %v1502, 1.0
  %v1527 = vadd.f32 %v1503, 1.0
  %v1528 = vadd.f32 %v1504, 1.0
  %v1529 = vadd.f32 %v1505, 1.0
  %v1530 = vadd.f32 %v1506, 1.0
  %v1531 = vadd.f32 %v1507, 1.0
  %v1532 = vadd.f32 %v1508, 1.0
  %v1533 = vadd.f32 %v1509, 1.0
  %v1534 = vadd.f32 %v1510, 1.0
  %v1535 = vadd.f32 %v1511, 1.0
  %v1536 = vadd.f32 %v1512, 1.0
  %v1537 = vadd.f32 %v1513, 1.0
  %v1538 = vadd.f32 %v1514, 1.0
  %v1539 = vadd.f32 %v1515, 1.0
  %v1540 = vadd.f32 %v1516, 1.0
  %v1541 = vadd.f32 %v1517, 1.0
  %v1542 = vadd.f32 %v1518, 1.0
  %v1543 = vadd.f32 %v1519, 1.0
  %v1544 = vadd.f32 %v1520, 1.0
  %v1545 = vadd.f32 %v1521, 1.0
  %v1546 = vadd.f32 %v1522, 1.0
  %v1547 = vadd.f32 %v1523, 1.0
  %v1548 = vadd.f32 %v1524, 1.0
  %v1549 = vadd.f32 %v1525, 1.0
  %v1550 = vmul.f32 %v1526, 0.5
  %v1551 = vmul.f32 %v1527, 0.5
  %v1552 = vmul.f32 %v1528, 0.5
  %v1553 = vmul.f32 %v1529, 0.5
  %v1554 = vmul.f32 %v1530, 0.5
  %v1555 = vmul.f32 %v1531, 0.5
  %v1556 = vmul.f32 %v1532, 0.5
  %v1557 = vmul.f32 %v1533, 0.5
  %v1558 = vmul.f32 %v1534, 0.5
  %v1559 = vmul.f32 %v1535, 0.5
  %v1560 = vmul.f32 %v1536, 0.5
  %v1561 = vmul.f32 %v1537, 0.5
  %v1562 = vmul.f32 %v1538, 0.5
  %v1563 = vmul.f32 %v1539, 0.5
  %v1564 = vmul.f32 %v1540, 0.5
  %v1565 = vmul.f32 %v1541, 0.5
  %v1566 = vmul.f32 %v1542, 0.5
  %v1567 = vmul.f32 %v1543, 0.5
  %v1568 = vmul.f32 %v1544, 0.5
  %v1569 = vmul.f32 %v1545, 0.5
  %v1570 = vmul.f32 %v1546, 0.5
  %v1571 = vmul.f32 %v1547, 0.5
  %v1572 = vmul.f32 %v1548, 0.5
  %v1573 = vmul.f32 %v1549, 0.5
  %v1574 = vtanh.pop %v1449
  %v1575 = vtanh.pop %v1453
  %v1576 = vtanh.pop %v1457
  %v1577 = vtanh.pop %v1461
  %v1578 = vtanh.pop %v1465
  %v1579 = vtanh.pop %v1469
  %v1580 = vtanh.pop %v1473
  %v1581 = vtanh.pop %v1477
  %v1590 = vrot.slane %v1266, 7
  %v1591 = vrot.slane %v1267, 7
  %v1592 = vrot.slane %v1268, 7
  %v1593 = vrot.slane %v1269, 7
  %v1594 = vrot.slane %v1270, 7
  %v1595 = vrot.slane %v1271, 7
  %v1596 = vrot.slane %v1272, 7
  %v1597 = vrot.slane %v1273, 7
  %v1606 = vmul.f32 %v1551, %v1590
  %v1607 = vmul.f32 %v1554, %v1591
  %v1608 = vmul.f32 %v1557, %v1592
  %v1609 = vmul.f32 %v1560, %v1593
  %v1610 = vmul.f32 %v1563, %v1594
  %v1611 = vmul.f32 %v1566, %v1595
  %v1612 = vmul.f32 %v1569, %v1596
  %v1613 = vmul.f32 %v1572, %v1597
  %v1614 = vmul.f32 %v1550, %v1574
  %v1615 = vmul.f32 %v1553, %v1575
  %v1616 = vmul.f32 %v1556, %v1576
  %v1617 = vmul.f32 %v1559, %v1577
  %v1618 = vmul.f32 %v1562, %v1578
  %v1619 = vmul.f32 %v1565, %v1579
  %v1620 = vmul.f32 %v1568, %v1580
  %v1621 = vmul.f32 %v1571, %v1581
  %v1622 = vadd.f32 %v1606, %v1614
  %v1623 = vadd.f32 %v1607, %v1615
  %v1624 = vadd.f32 %v1608, %v1616
  %v1625 = vadd.f32 %v1609, %v1617
  %v1626 = vadd.f32 %v1610, %v1618
  %v1627 = vadd.f32 %v1611, %v1619
  %v1628 = vadd.f32 %v1612, %v1620
  %v1629 = vadd.f32 %v1613, %v1621
  %v1630 = vtanh.pop %v1622
  %v1631 = vtanh.pop %v1623
  %v1632 = vtanh.pop %v1624
  %v1633 = vtanh.pop %v1625
  %v1634 = vtanh.pop %v1626
  %v1635 = vtanh.pop %v1627
  %v1636 = vtanh.pop %v1628
  %v1637 = vtanh.pop %v1629
  %v1638 = vmul.f32 %v1552, %v1630
  %v1639 = vmul.f32 %v1555, %v1631
  %v1640 = vmul.f32 %v1558, %v1632
  %v1641 = vmul.f32 %v1561, %v1633
  %v1642 = vmul.f32 %v1564, %v1634
  %v1643 = vmul.f32 %v1567, %v1635
  %v1644 = vmul.f32 %v1570, %v1636
  %v1645 = vmul.f32 %v1573, %v1637
  %v1646 = vpack.c.bf16 %v1638, %v1638
  %v1647 = vpack.c.bf16 %v1639, %v1639
  %v1648 = vpack.c.bf16 %v1640, %v1640
  %v1649 = vpack.c.bf16 %v1641, %v1641
  %v1650 = vpack.c.bf16 %v1642, %v1642
  %v1651 = vpack.c.bf16 %v1643, %v1643
  %v1652 = vpack.c.bf16 %v1644, %v1644
  %v1653 = vpack.c.bf16 %v1645, %v1645
  %v1662 = vunpack.c.l.b16 %v1646
  %v1663 = vunpack.c.l.b16 %v1647
  %v1664 = vunpack.c.l.b16 %v1648
  %v1665 = vunpack.c.l.b16 %v1649
  %v1666 = vunpack.c.l.b16 %v1650
  %v1667 = vunpack.c.l.b16 %v1651
  %v1668 = vunpack.c.l.b16 %v1652
  %v1669 = vunpack.c.l.b16 %v1653
  %v1670 = vrot.slane %v1662, 3
  %v1671 = vrot.slane %v1663, 2
  %v1672 = vsel %vm596, %v1671, %v1670
  %v1673 = vrot.slane %v1664, 1
  %v1674 = vsel %vm599, %v1673, %v1672
  %v1675 = vsel %vm602, %v1665, %v1674
  %v1676 = vrot.slane %v1666, 7
  %v1677 = vsel %vm605, %v1676, %v1675
  %v1678 = vrot.slane %v1667, 6
  %v1679 = vsel %vm608, %v1678, %v1677
  %v1680 = vrot.slane %v1668, 5
  %v1681 = vsel %vm611, %v1680, %v1679
  %v1682 = vrot.slane %v1669, 4
  %v1683 = vsel %vm614, %v1682, %v1681
  %v1684 = vpack.c.b16 %v1683, %v1683
  %1686 = vmatpush.bf16.msra.mxu0 %v227
  %1687 = vmatpush.bf16.msra.mxu0 %v223
  %1688 = vmatpush.bf16.msra.mxu0 %v219
  %1689 = vmatpush.bf16.msra.mxu0 %v215
  %1690 = vmatpush.bf16.msra.mxu0 %v211
  %1691 = vmatpush.bf16.msra.mxu0 %v207
  %1692 = vmatpush.bf16.msra.mxu0 %v203
  %1693 = vmatpush.bf16.msra.mxu0 %v199
  %1694 = vmatmul.bf16.gmra.mxu0 %v1684
  %v1695 = vpop.f32.mrf.mxu0
  %v1696 = vadd.f32 0.0, %v1695
  %v1697 = vpop.f32.mrf.mxu0
  %1698 = vdwg.mxu0
  %1699 = vmatpush.bf16.msra.mxu0 %v228
  %1700 = vmatpush.bf16.msra.mxu0 %v224
  %1701 = vmatpush.bf16.msra.mxu0 %v220
  %1702 = vmatpush.bf16.msra.mxu0 %v216
  %1703 = vmatpush.bf16.msra.mxu0 %v212
  %1704 = vmatpush.bf16.msra.mxu0 %v208
  %1705 = vmatpush.bf16.msra.mxu0 %v204
  %1706 = vmatpush.bf16.msra.mxu0 %v200
  %1707 = vmatmul.bf16.gmra.mxu0 %v1684
  %v1708 = vpop.f32.mrf.mxu0
  %v1709 = vadd.f32 0.0, %v1708
  %v1710 = vpop.f32.mrf.mxu0
  %1711 = vdwg.mxu0
  %1712 = vmatpush.bf16.msra.mxu0 %v229
  %1713 = vmatpush.bf16.msra.mxu0 %v225
  %1714 = vmatpush.bf16.msra.mxu0 %v221
  %1715 = vmatpush.bf16.msra.mxu0 %v217
  %1716 = vmatpush.bf16.msra.mxu0 %v213
  %1717 = vmatpush.bf16.msra.mxu0 %v209
  %1718 = vmatpush.bf16.msra.mxu0 %v205
  %1719 = vmatpush.bf16.msra.mxu0 %v201
  %1720 = vmatmul.bf16.gmra.mxu0 %v1684
  %v1721 = vpop.f32.mrf.mxu0
  %v1722 = vadd.f32 0.0, %v1721
  %v1723 = vpop.f32.mrf.mxu0
  %1724 = vdwg.mxu0
  %1725 = vmatpush.bf16.msra.mxu0 %v230
  %1726 = vmatpush.bf16.msra.mxu0 %v226
  %1727 = vmatpush.bf16.msra.mxu0 %v222
  %1728 = vmatpush.bf16.msra.mxu0 %v218
  %1729 = vmatpush.bf16.msra.mxu0 %v214
  %1730 = vmatpush.bf16.msra.mxu0 %v210
  %1731 = vmatpush.bf16.msra.mxu0 %v206
  %1732 = vmatpush.bf16.msra.mxu0 %v202
  %1733 = vmatmul.bf16.gmra.mxu0 %v1684
  %v1734 = vpop.f32.mrf.mxu0
  %v1735 = vadd.f32 0.0, %v1734
  %v1736 = vpop.f32.mrf.mxu0
  %1737 = vdwg.mxu0
  %v1742 = vrot.slane %v1696, 4
  %v1743 = vrot.slane %v1709, 4
  %v1744 = vrot.slane %v1722, 4
  %v1745 = vrot.slane %v1735, 4
  %v1746 = vrot.slane %v1696, 5
  %v1747 = vrot.slane %v1709, 5
  %v1748 = vrot.slane %v1722, 5
  %v1749 = vrot.slane %v1735, 5
  %v1750 = vrot.slane %v1696, 6
  %v1751 = vrot.slane %v1709, 6
  %v1752 = vrot.slane %v1722, 6
  %v1753 = vrot.slane %v1735, 6
  %v1754 = vrot.slane %v1696, 7
  %v1755 = vrot.slane %v1709, 7
  %v1756 = vrot.slane %v1722, 7
  %v1757 = vrot.slane %v1735, 7
  %v1758 = vrot.slane %v1696, 1
  %v1759 = vrot.slane %v1709, 1
  %v1760 = vrot.slane %v1722, 1
  %v1761 = vrot.slane %v1735, 1
  %v1762 = vrot.slane %v1696, 2
  %v1763 = vrot.slane %v1709, 2
  %v1764 = vrot.slane %v1722, 2
  %v1765 = vrot.slane %v1735, 2
  %v1766 = vrot.slane %v1696, 3
  %v1767 = vrot.slane %v1709, 3
  %v1768 = vrot.slane %v1722, 3
  %v1769 = vrot.slane %v1735, 3
  %v1802 = vadd.f32 %v68, %v1742
  %v1803 = vadd.f32 %v69, %v1743
  %v1804 = vadd.f32 %v70, %v1744
  %v1805 = vadd.f32 %v71, %v1745
  %v1806 = vadd.f32 %v72, %v1746
  %v1807 = vadd.f32 %v73, %v1747
  %v1808 = vadd.f32 %v74, %v1748
  %v1809 = vadd.f32 %v75, %v1749
  %v1810 = vadd.f32 %v76, %v1750
  %v1811 = vadd.f32 %v77, %v1751
  %v1812 = vadd.f32 %v78, %v1752
  %v1813 = vadd.f32 %v79, %v1753
  %v1814 = vadd.f32 %v80, %v1754
  %v1815 = vadd.f32 %v81, %v1755
  %v1816 = vadd.f32 %v82, %v1756
  %v1817 = vadd.f32 %v83, %v1757
  %v1818 = vadd.f32 %v84, %v1696
  %v1819 = vadd.f32 %v85, %v1709
  %v1820 = vadd.f32 %v86, %v1722
  %v1821 = vadd.f32 %v87, %v1735
  %v1822 = vadd.f32 %v88, %v1758
  %v1823 = vadd.f32 %v89, %v1759
  %v1824 = vadd.f32 %v90, %v1760
  %v1825 = vadd.f32 %v91, %v1761
  %v1826 = vadd.f32 %v92, %v1762
  %v1827 = vadd.f32 %v93, %v1763
  %v1828 = vadd.f32 %v94, %v1764
  %v1829 = vadd.f32 %v95, %v1765
  %v1830 = vadd.f32 %v96, %v1766
  %v1831 = vadd.f32 %v97, %v1767
  %v1832 = vadd.f32 %v98, %v1768
  %v1833 = vadd.f32 %v99, %v1769
  %v1834 = vmul.f32 %v1802, 0.5
  %v1835 = vmul.f32 %v1803, 0.5
  %v1836 = vmul.f32 %v1804, 0.5
  %v1837 = vmul.f32 %v1806, 0.5
  %v1838 = vmul.f32 %v1807, 0.5
  %v1839 = vmul.f32 %v1808, 0.5
  %v1840 = vmul.f32 %v1810, 0.5
  %v1841 = vmul.f32 %v1811, 0.5
  %v1842 = vmul.f32 %v1812, 0.5
  %v1843 = vmul.f32 %v1814, 0.5
  %v1844 = vmul.f32 %v1815, 0.5
  %v1845 = vmul.f32 %v1816, 0.5
  %v1846 = vmul.f32 %v1818, 0.5
  %v1847 = vmul.f32 %v1819, 0.5
  %v1848 = vmul.f32 %v1820, 0.5
  %v1849 = vmul.f32 %v1822, 0.5
  %v1850 = vmul.f32 %v1823, 0.5
  %v1851 = vmul.f32 %v1824, 0.5
  %v1852 = vmul.f32 %v1826, 0.5
  %v1853 = vmul.f32 %v1827, 0.5
  %v1854 = vmul.f32 %v1828, 0.5
  %v1855 = vmul.f32 %v1830, 0.5
  %v1856 = vmul.f32 %v1831, 0.5
  %v1857 = vmul.f32 %v1832, 0.5
  %v1858 = vtanh.pop %v1834
  %v1859 = vtanh.pop %v1835
  %v1860 = vtanh.pop %v1836
  %v1861 = vtanh.pop %v1837
  %v1862 = vtanh.pop %v1838
  %v1863 = vtanh.pop %v1839
  %v1864 = vtanh.pop %v1840
  %v1865 = vtanh.pop %v1841
  %v1866 = vtanh.pop %v1842
  %v1867 = vtanh.pop %v1843
  %v1868 = vtanh.pop %v1844
  %v1869 = vtanh.pop %v1845
  %v1870 = vtanh.pop %v1846
  %v1871 = vtanh.pop %v1847
  %v1872 = vtanh.pop %v1848
  %v1873 = vtanh.pop %v1849
  %v1874 = vtanh.pop %v1850
  %v1875 = vtanh.pop %v1851
  %v1876 = vtanh.pop %v1852
  %v1877 = vtanh.pop %v1853
  %v1878 = vtanh.pop %v1854
  %v1879 = vtanh.pop %v1855
  %v1880 = vtanh.pop %v1856
  %v1881 = vtanh.pop %v1857
  %v1882 = vadd.f32 %v1858, 1.0
  %v1883 = vadd.f32 %v1859, 1.0
  %v1884 = vadd.f32 %v1860, 1.0
  %v1885 = vadd.f32 %v1861, 1.0
  %v1886 = vadd.f32 %v1862, 1.0
  %v1887 = vadd.f32 %v1863, 1.0
  %v1888 = vadd.f32 %v1864, 1.0
  %v1889 = vadd.f32 %v1865, 1.0
  %v1890 = vadd.f32 %v1866, 1.0
  %v1891 = vadd.f32 %v1867, 1.0
  %v1892 = vadd.f32 %v1868, 1.0
  %v1893 = vadd.f32 %v1869, 1.0
  %v1894 = vadd.f32 %v1870, 1.0
  %v1895 = vadd.f32 %v1871, 1.0
  %v1896 = vadd.f32 %v1872, 1.0
  %v1897 = vadd.f32 %v1873, 1.0
  %v1898 = vadd.f32 %v1874, 1.0
  %v1899 = vadd.f32 %v1875, 1.0
  %v1900 = vadd.f32 %v1876, 1.0
  %v1901 = vadd.f32 %v1877, 1.0
  %v1902 = vadd.f32 %v1878, 1.0
  %v1903 = vadd.f32 %v1879, 1.0
  %v1904 = vadd.f32 %v1880, 1.0
  %v1905 = vadd.f32 %v1881, 1.0
  %v1906 = vmul.f32 %v1882, 0.5
  %v1907 = vmul.f32 %v1883, 0.5
  %v1908 = vmul.f32 %v1884, 0.5
  %v1909 = vmul.f32 %v1885, 0.5
  %v1910 = vmul.f32 %v1886, 0.5
  %v1911 = vmul.f32 %v1887, 0.5
  %v1912 = vmul.f32 %v1888, 0.5
  %v1913 = vmul.f32 %v1889, 0.5
  %v1914 = vmul.f32 %v1890, 0.5
  %v1915 = vmul.f32 %v1891, 0.5
  %v1916 = vmul.f32 %v1892, 0.5
  %v1917 = vmul.f32 %v1893, 0.5
  %v1918 = vmul.f32 %v1894, 0.5
  %v1919 = vmul.f32 %v1895, 0.5
  %v1920 = vmul.f32 %v1896, 0.5
  %v1921 = vmul.f32 %v1897, 0.5
  %v1922 = vmul.f32 %v1898, 0.5
  %v1923 = vmul.f32 %v1899, 0.5
  %v1924 = vmul.f32 %v1900, 0.5
  %v1925 = vmul.f32 %v1901, 0.5
  %v1926 = vmul.f32 %v1902, 0.5
  %v1927 = vmul.f32 %v1903, 0.5
  %v1928 = vmul.f32 %v1904, 0.5
  %v1929 = vmul.f32 %v1905, 0.5
  %v1930 = vtanh.pop %v1805
  %v1931 = vtanh.pop %v1809
  %v1932 = vtanh.pop %v1813
  %v1933 = vtanh.pop %v1817
  %v1934 = vtanh.pop %v1821
  %v1935 = vtanh.pop %v1825
  %v1936 = vtanh.pop %v1829
  %v1937 = vtanh.pop %v1833
  %v1946 = vrot.slane %v1622, 7
  %v1947 = vrot.slane %v1623, 7
  %v1948 = vrot.slane %v1624, 7
  %v1949 = vrot.slane %v1625, 7
  %v1950 = vrot.slane %v1626, 7
  %v1951 = vrot.slane %v1627, 7
  %v1952 = vrot.slane %v1628, 7
  %v1953 = vrot.slane %v1629, 7
  %v1962 = vmul.f32 %v1907, %v1946
  %v1963 = vmul.f32 %v1910, %v1947
  %v1964 = vmul.f32 %v1913, %v1948
  %v1965 = vmul.f32 %v1916, %v1949
  %v1966 = vmul.f32 %v1919, %v1950
  %v1967 = vmul.f32 %v1922, %v1951
  %v1968 = vmul.f32 %v1925, %v1952
  %v1969 = vmul.f32 %v1928, %v1953
  %v1970 = vmul.f32 %v1906, %v1930
  %v1971 = vmul.f32 %v1909, %v1931
  %v1972 = vmul.f32 %v1912, %v1932
  %v1973 = vmul.f32 %v1915, %v1933
  %v1974 = vmul.f32 %v1918, %v1934
  %v1975 = vmul.f32 %v1921, %v1935
  %v1976 = vmul.f32 %v1924, %v1936
  %v1977 = vmul.f32 %v1927, %v1937
  %v1978 = vadd.f32 %v1962, %v1970
  %v1979 = vadd.f32 %v1963, %v1971
  %v1980 = vadd.f32 %v1964, %v1972
  %v1981 = vadd.f32 %v1965, %v1973
  %v1982 = vadd.f32 %v1966, %v1974
  %v1983 = vadd.f32 %v1967, %v1975
  %v1984 = vadd.f32 %v1968, %v1976
  %v1985 = vadd.f32 %v1969, %v1977
  %v1986 = vtanh.pop %v1978
  %v1987 = vtanh.pop %v1979
  %v1988 = vtanh.pop %v1980
  %v1989 = vtanh.pop %v1981
  %v1990 = vtanh.pop %v1982
  %v1991 = vtanh.pop %v1983
  %v1992 = vtanh.pop %v1984
  %v1993 = vtanh.pop %v1985
  %v1994 = vmul.f32 %v1908, %v1986
  %v1995 = vmul.f32 %v1911, %v1987
  %v1996 = vmul.f32 %v1914, %v1988
  %v1997 = vmul.f32 %v1917, %v1989
  %v1998 = vmul.f32 %v1920, %v1990
  %v1999 = vmul.f32 %v1923, %v1991
  %v2000 = vmul.f32 %v1926, %v1992
  %v2001 = vmul.f32 %v1929, %v1993
  %v2002 = vpack.c.bf16 %v1994, %v1994
  %v2003 = vpack.c.bf16 %v1995, %v1995
  %v2004 = vpack.c.bf16 %v1996, %v1996
  %v2005 = vpack.c.bf16 %v1997, %v1997
  %v2006 = vpack.c.bf16 %v1998, %v1998
  %v2007 = vpack.c.bf16 %v1999, %v1999
  %v2008 = vpack.c.bf16 %v2000, %v2000
  %v2009 = vpack.c.bf16 %v2001, %v2001
  %v2018 = vunpack.c.l.b16 %v2002
  %v2019 = vunpack.c.l.b16 %v2003
  %v2020 = vunpack.c.l.b16 %v2004
  %v2021 = vunpack.c.l.b16 %v2005
  %v2022 = vunpack.c.l.b16 %v2006
  %v2023 = vunpack.c.l.b16 %v2007
  %v2024 = vunpack.c.l.b16 %v2008
  %v2025 = vunpack.c.l.b16 %v2009
  %v2026 = vrot.slane %v2018, 4
  %v2027 = vrot.slane %v2019, 3
  %v2028 = vsel %vm596, %v2027, %v2026
  %v2029 = vrot.slane %v2020, 2
  %v2030 = vsel %vm599, %v2029, %v2028
  %v2031 = vrot.slane %v2021, 1
  %v2032 = vsel %vm602, %v2031, %v2030
  %v2033 = vsel %vm605, %v2022, %v2032
  %v2034 = vrot.slane %v2023, 7
  %v2035 = vsel %vm608, %v2034, %v2033
  %v2036 = vrot.slane %v2024, 6
  %v2037 = vsel %vm611, %v2036, %v2035
  %v2038 = vrot.slane %v2025, 5
  %v2039 = vsel %vm614, %v2038, %v2037
  %v2040 = vpack.c.b16 %v2039, %v2039
  %2042 = vmatpush.bf16.msra.mxu0 %v227
  %2043 = vmatpush.bf16.msra.mxu0 %v223
  %2044 = vmatpush.bf16.msra.mxu0 %v219
  %2045 = vmatpush.bf16.msra.mxu0 %v215
  %2046 = vmatpush.bf16.msra.mxu0 %v211
  %2047 = vmatpush.bf16.msra.mxu0 %v207
  %2048 = vmatpush.bf16.msra.mxu0 %v203
  %2049 = vmatpush.bf16.msra.mxu0 %v199
  %2050 = vmatmul.bf16.gmra.mxu0 %v2040
  %v2051 = vpop.f32.mrf.mxu0
  %v2052 = vadd.f32 0.0, %v2051
  %v2053 = vpop.f32.mrf.mxu0
  %2054 = vdwg.mxu0
  %2055 = vmatpush.bf16.msra.mxu0 %v228
  %2056 = vmatpush.bf16.msra.mxu0 %v224
  %2057 = vmatpush.bf16.msra.mxu0 %v220
  %2058 = vmatpush.bf16.msra.mxu0 %v216
  %2059 = vmatpush.bf16.msra.mxu0 %v212
  %2060 = vmatpush.bf16.msra.mxu0 %v208
  %2061 = vmatpush.bf16.msra.mxu0 %v204
  %2062 = vmatpush.bf16.msra.mxu0 %v200
  %2063 = vmatmul.bf16.gmra.mxu0 %v2040
  %v2064 = vpop.f32.mrf.mxu0
  %v2065 = vadd.f32 0.0, %v2064
  %v2066 = vpop.f32.mrf.mxu0
  %2067 = vdwg.mxu0
  %2068 = vmatpush.bf16.msra.mxu0 %v229
  %2069 = vmatpush.bf16.msra.mxu0 %v225
  %2070 = vmatpush.bf16.msra.mxu0 %v221
  %2071 = vmatpush.bf16.msra.mxu0 %v217
  %2072 = vmatpush.bf16.msra.mxu0 %v213
  %2073 = vmatpush.bf16.msra.mxu0 %v209
  %2074 = vmatpush.bf16.msra.mxu0 %v205
  %2075 = vmatpush.bf16.msra.mxu0 %v201
  %2076 = vmatmul.bf16.gmra.mxu0 %v2040
  %v2077 = vpop.f32.mrf.mxu0
  %v2078 = vadd.f32 0.0, %v2077
  %v2079 = vpop.f32.mrf.mxu0
  %2080 = vdwg.mxu0
  %2081 = vmatpush.bf16.msra.mxu0 %v230
  %2082 = vmatpush.bf16.msra.mxu0 %v226
  %2083 = vmatpush.bf16.msra.mxu0 %v222
  %2084 = vmatpush.bf16.msra.mxu0 %v218
  %2085 = vmatpush.bf16.msra.mxu0 %v214
  %2086 = vmatpush.bf16.msra.mxu0 %v210
  %2087 = vmatpush.bf16.msra.mxu0 %v206
  %2088 = vmatpush.bf16.msra.mxu0 %v202
  %2089 = vmatmul.bf16.gmra.mxu0 %v2040
  %v2090 = vpop.f32.mrf.mxu0
  %v2091 = vadd.f32 0.0, %v2090
  %v2092 = vpop.f32.mrf.mxu0
  %2093 = vdwg.mxu0
  %v2098 = vrot.slane %v2052, 3
  %v2099 = vrot.slane %v2065, 3
  %v2100 = vrot.slane %v2078, 3
  %v2101 = vrot.slane %v2091, 3
  %v2102 = vrot.slane %v2052, 4
  %v2103 = vrot.slane %v2065, 4
  %v2104 = vrot.slane %v2078, 4
  %v2105 = vrot.slane %v2091, 4
  %v2106 = vrot.slane %v2052, 5
  %v2107 = vrot.slane %v2065, 5
  %v2108 = vrot.slane %v2078, 5
  %v2109 = vrot.slane %v2091, 5
  %v2110 = vrot.slane %v2052, 6
  %v2111 = vrot.slane %v2065, 6
  %v2112 = vrot.slane %v2078, 6
  %v2113 = vrot.slane %v2091, 6
  %v2114 = vrot.slane %v2052, 7
  %v2115 = vrot.slane %v2065, 7
  %v2116 = vrot.slane %v2078, 7
  %v2117 = vrot.slane %v2091, 7
  %v2118 = vrot.slane %v2052, 1
  %v2119 = vrot.slane %v2065, 1
  %v2120 = vrot.slane %v2078, 1
  %v2121 = vrot.slane %v2091, 1
  %v2122 = vrot.slane %v2052, 2
  %v2123 = vrot.slane %v2065, 2
  %v2124 = vrot.slane %v2078, 2
  %v2125 = vrot.slane %v2091, 2
  %v2158 = vadd.f32 %v68, %v2098
  %v2159 = vadd.f32 %v69, %v2099
  %v2160 = vadd.f32 %v70, %v2100
  %v2161 = vadd.f32 %v71, %v2101
  %v2162 = vadd.f32 %v72, %v2102
  %v2163 = vadd.f32 %v73, %v2103
  %v2164 = vadd.f32 %v74, %v2104
  %v2165 = vadd.f32 %v75, %v2105
  %v2166 = vadd.f32 %v76, %v2106
  %v2167 = vadd.f32 %v77, %v2107
  %v2168 = vadd.f32 %v78, %v2108
  %v2169 = vadd.f32 %v79, %v2109
  %v2170 = vadd.f32 %v80, %v2110
  %v2171 = vadd.f32 %v81, %v2111
  %v2172 = vadd.f32 %v82, %v2112
  %v2173 = vadd.f32 %v83, %v2113
  %v2174 = vadd.f32 %v84, %v2114
  %v2175 = vadd.f32 %v85, %v2115
  %v2176 = vadd.f32 %v86, %v2116
  %v2177 = vadd.f32 %v87, %v2117
  %v2178 = vadd.f32 %v88, %v2052
  %v2179 = vadd.f32 %v89, %v2065
  %v2180 = vadd.f32 %v90, %v2078
  %v2181 = vadd.f32 %v91, %v2091
  %v2182 = vadd.f32 %v92, %v2118
  %v2183 = vadd.f32 %v93, %v2119
  %v2184 = vadd.f32 %v94, %v2120
  %v2185 = vadd.f32 %v95, %v2121
  %v2186 = vadd.f32 %v96, %v2122
  %v2187 = vadd.f32 %v97, %v2123
  %v2188 = vadd.f32 %v98, %v2124
  %v2189 = vadd.f32 %v99, %v2125
  %v2190 = vmul.f32 %v2158, 0.5
  %v2191 = vmul.f32 %v2159, 0.5
  %v2192 = vmul.f32 %v2160, 0.5
  %v2193 = vmul.f32 %v2162, 0.5
  %v2194 = vmul.f32 %v2163, 0.5
  %v2195 = vmul.f32 %v2164, 0.5
  %v2196 = vmul.f32 %v2166, 0.5
  %v2197 = vmul.f32 %v2167, 0.5
  %v2198 = vmul.f32 %v2168, 0.5
  %v2199 = vmul.f32 %v2170, 0.5
  %v2200 = vmul.f32 %v2171, 0.5
  %v2201 = vmul.f32 %v2172, 0.5
  %v2202 = vmul.f32 %v2174, 0.5
  %v2203 = vmul.f32 %v2175, 0.5
  %v2204 = vmul.f32 %v2176, 0.5
  %v2205 = vmul.f32 %v2178, 0.5
  %v2206 = vmul.f32 %v2179, 0.5
  %v2207 = vmul.f32 %v2180, 0.5
  %v2208 = vmul.f32 %v2182, 0.5
  %v2209 = vmul.f32 %v2183, 0.5
  %v2210 = vmul.f32 %v2184, 0.5
  %v2211 = vmul.f32 %v2186, 0.5
  %v2212 = vmul.f32 %v2187, 0.5
  %v2213 = vmul.f32 %v2188, 0.5
  %v2214 = vtanh.pop %v2190
  %v2215 = vtanh.pop %v2191
  %v2216 = vtanh.pop %v2192
  %v2217 = vtanh.pop %v2193
  %v2218 = vtanh.pop %v2194
  %v2219 = vtanh.pop %v2195
  %v2220 = vtanh.pop %v2196
  %v2221 = vtanh.pop %v2197
  %v2222 = vtanh.pop %v2198
  %v2223 = vtanh.pop %v2199
  %v2224 = vtanh.pop %v2200
  %v2225 = vtanh.pop %v2201
  %v2226 = vtanh.pop %v2202
  %v2227 = vtanh.pop %v2203
  %v2228 = vtanh.pop %v2204
  %v2229 = vtanh.pop %v2205
  %v2230 = vtanh.pop %v2206
  %v2231 = vtanh.pop %v2207
  %v2232 = vtanh.pop %v2208
  %v2233 = vtanh.pop %v2209
  %v2234 = vtanh.pop %v2210
  %v2235 = vtanh.pop %v2211
  %v2236 = vtanh.pop %v2212
  %v2237 = vtanh.pop %v2213
  %v2238 = vadd.f32 %v2214, 1.0
  %v2239 = vadd.f32 %v2215, 1.0
  %v2240 = vadd.f32 %v2216, 1.0
  %v2241 = vadd.f32 %v2217, 1.0
  %v2242 = vadd.f32 %v2218, 1.0
  %v2243 = vadd.f32 %v2219, 1.0
  %v2244 = vadd.f32 %v2220, 1.0
  %v2245 = vadd.f32 %v2221, 1.0
  %v2246 = vadd.f32 %v2222, 1.0
  %v2247 = vadd.f32 %v2223, 1.0
  %v2248 = vadd.f32 %v2224, 1.0
  %v2249 = vadd.f32 %v2225, 1.0
  %v2250 = vadd.f32 %v2226, 1.0
  %v2251 = vadd.f32 %v2227, 1.0
  %v2252 = vadd.f32 %v2228, 1.0
  %v2253 = vadd.f32 %v2229, 1.0
  %v2254 = vadd.f32 %v2230, 1.0
  %v2255 = vadd.f32 %v2231, 1.0
  %v2256 = vadd.f32 %v2232, 1.0
  %v2257 = vadd.f32 %v2233, 1.0
  %v2258 = vadd.f32 %v2234, 1.0
  %v2259 = vadd.f32 %v2235, 1.0
  %v2260 = vadd.f32 %v2236, 1.0
  %v2261 = vadd.f32 %v2237, 1.0
  %v2262 = vmul.f32 %v2238, 0.5
  %v2263 = vmul.f32 %v2239, 0.5
  %v2264 = vmul.f32 %v2240, 0.5
  %v2265 = vmul.f32 %v2241, 0.5
  %v2266 = vmul.f32 %v2242, 0.5
  %v2267 = vmul.f32 %v2243, 0.5
  %v2268 = vmul.f32 %v2244, 0.5
  %v2269 = vmul.f32 %v2245, 0.5
  %v2270 = vmul.f32 %v2246, 0.5
  %v2271 = vmul.f32 %v2247, 0.5
  %v2272 = vmul.f32 %v2248, 0.5
  %v2273 = vmul.f32 %v2249, 0.5
  %v2274 = vmul.f32 %v2250, 0.5
  %v2275 = vmul.f32 %v2251, 0.5
  %v2276 = vmul.f32 %v2252, 0.5
  %v2277 = vmul.f32 %v2253, 0.5
  %v2278 = vmul.f32 %v2254, 0.5
  %v2279 = vmul.f32 %v2255, 0.5
  %v2280 = vmul.f32 %v2256, 0.5
  %v2281 = vmul.f32 %v2257, 0.5
  %v2282 = vmul.f32 %v2258, 0.5
  %v2283 = vmul.f32 %v2259, 0.5
  %v2284 = vmul.f32 %v2260, 0.5
  %v2285 = vmul.f32 %v2261, 0.5
  %v2286 = vtanh.pop %v2161
  %v2287 = vtanh.pop %v2165
  %v2288 = vtanh.pop %v2169
  %v2289 = vtanh.pop %v2173
  %v2290 = vtanh.pop %v2177
  %v2291 = vtanh.pop %v2181
  %v2292 = vtanh.pop %v2185
  %v2293 = vtanh.pop %v2189
  %v2302 = vrot.slane %v1978, 7
  %v2303 = vrot.slane %v1979, 7
  %v2304 = vrot.slane %v1980, 7
  %v2305 = vrot.slane %v1981, 7
  %v2306 = vrot.slane %v1982, 7
  %v2307 = vrot.slane %v1983, 7
  %v2308 = vrot.slane %v1984, 7
  %v2309 = vrot.slane %v1985, 7
  %v2318 = vmul.f32 %v2263, %v2302
  %v2319 = vmul.f32 %v2266, %v2303
  %v2320 = vmul.f32 %v2269, %v2304
  %v2321 = vmul.f32 %v2272, %v2305
  %v2322 = vmul.f32 %v2275, %v2306
  %v2323 = vmul.f32 %v2278, %v2307
  %v2324 = vmul.f32 %v2281, %v2308
  %v2325 = vmul.f32 %v2284, %v2309
  %v2326 = vmul.f32 %v2262, %v2286
  %v2327 = vmul.f32 %v2265, %v2287
  %v2328 = vmul.f32 %v2268, %v2288
  %v2329 = vmul.f32 %v2271, %v2289
  %v2330 = vmul.f32 %v2274, %v2290
  %v2331 = vmul.f32 %v2277, %v2291
  %v2332 = vmul.f32 %v2280, %v2292
  %v2333 = vmul.f32 %v2283, %v2293
  %v2334 = vadd.f32 %v2318, %v2326
  %v2335 = vadd.f32 %v2319, %v2327
  %v2336 = vadd.f32 %v2320, %v2328
  %v2337 = vadd.f32 %v2321, %v2329
  %v2338 = vadd.f32 %v2322, %v2330
  %v2339 = vadd.f32 %v2323, %v2331
  %v2340 = vadd.f32 %v2324, %v2332
  %v2341 = vadd.f32 %v2325, %v2333
  %v2342 = vtanh.pop %v2334
  %v2343 = vtanh.pop %v2335
  %v2344 = vtanh.pop %v2336
  %v2345 = vtanh.pop %v2337
  %v2346 = vtanh.pop %v2338
  %v2347 = vtanh.pop %v2339
  %v2348 = vtanh.pop %v2340
  %v2349 = vtanh.pop %v2341
  %v2350 = vmul.f32 %v2264, %v2342
  %v2351 = vmul.f32 %v2267, %v2343
  %v2352 = vmul.f32 %v2270, %v2344
  %v2353 = vmul.f32 %v2273, %v2345
  %v2354 = vmul.f32 %v2276, %v2346
  %v2355 = vmul.f32 %v2279, %v2347
  %v2356 = vmul.f32 %v2282, %v2348
  %v2357 = vmul.f32 %v2285, %v2349
  %v2358 = vpack.c.bf16 %v2350, %v2350
  %v2359 = vpack.c.bf16 %v2351, %v2351
  %v2360 = vpack.c.bf16 %v2352, %v2352
  %v2361 = vpack.c.bf16 %v2353, %v2353
  %v2362 = vpack.c.bf16 %v2354, %v2354
  %v2363 = vpack.c.bf16 %v2355, %v2355
  %v2364 = vpack.c.bf16 %v2356, %v2356
  %v2365 = vpack.c.bf16 %v2357, %v2357
  %v2374 = vunpack.c.l.b16 %v2358
  %v2375 = vunpack.c.l.b16 %v2359
  %v2376 = vunpack.c.l.b16 %v2360
  %v2377 = vunpack.c.l.b16 %v2361
  %v2378 = vunpack.c.l.b16 %v2362
  %v2379 = vunpack.c.l.b16 %v2363
  %v2380 = vunpack.c.l.b16 %v2364
  %v2381 = vunpack.c.l.b16 %v2365
  %v2382 = vrot.slane %v2374, 5
  %v2383 = vrot.slane %v2375, 4
  %v2384 = vsel %vm596, %v2383, %v2382
  %v2385 = vrot.slane %v2376, 3
  %v2386 = vsel %vm599, %v2385, %v2384
  %v2387 = vrot.slane %v2377, 2
  %v2388 = vsel %vm602, %v2387, %v2386
  %v2389 = vrot.slane %v2378, 1
  %v2390 = vsel %vm605, %v2389, %v2388
  %v2391 = vsel %vm608, %v2379, %v2390
  %v2392 = vrot.slane %v2380, 7
  %v2393 = vsel %vm611, %v2392, %v2391
  %v2394 = vrot.slane %v2381, 6
  %v2395 = vsel %vm614, %v2394, %v2393
  %v2396 = vpack.c.b16 %v2395, %v2395
  %2398 = vmatpush.bf16.msra.mxu0 %v227
  %2399 = vmatpush.bf16.msra.mxu0 %v223
  %2400 = vmatpush.bf16.msra.mxu0 %v219
  %2401 = vmatpush.bf16.msra.mxu0 %v215
  %2402 = vmatpush.bf16.msra.mxu0 %v211
  %2403 = vmatpush.bf16.msra.mxu0 %v207
  %2404 = vmatpush.bf16.msra.mxu0 %v203
  %2405 = vmatpush.bf16.msra.mxu0 %v199
  %2406 = vmatmul.bf16.gmra.mxu0 %v2396
  %v2407 = vpop.f32.mrf.mxu0
  %v2408 = vadd.f32 0.0, %v2407
  %v2409 = vpop.f32.mrf.mxu0
  %2410 = vdwg.mxu0
  %2411 = vmatpush.bf16.msra.mxu0 %v228
  %2412 = vmatpush.bf16.msra.mxu0 %v224
  %2413 = vmatpush.bf16.msra.mxu0 %v220
  %2414 = vmatpush.bf16.msra.mxu0 %v216
  %2415 = vmatpush.bf16.msra.mxu0 %v212
  %2416 = vmatpush.bf16.msra.mxu0 %v208
  %2417 = vmatpush.bf16.msra.mxu0 %v204
  %2418 = vmatpush.bf16.msra.mxu0 %v200
  %2419 = vmatmul.bf16.gmra.mxu0 %v2396
  %v2420 = vpop.f32.mrf.mxu0
  %v2421 = vadd.f32 0.0, %v2420
  %v2422 = vpop.f32.mrf.mxu0
  %2423 = vdwg.mxu0
  %2424 = vmatpush.bf16.msra.mxu0 %v229
  %2425 = vmatpush.bf16.msra.mxu0 %v225
  %2426 = vmatpush.bf16.msra.mxu0 %v221
  %2427 = vmatpush.bf16.msra.mxu0 %v217
  %2428 = vmatpush.bf16.msra.mxu0 %v213
  %2429 = vmatpush.bf16.msra.mxu0 %v209
  %2430 = vmatpush.bf16.msra.mxu0 %v205
  %2431 = vmatpush.bf16.msra.mxu0 %v201
  %2432 = vmatmul.bf16.gmra.mxu0 %v2396
  %v2433 = vpop.f32.mrf.mxu0
  %v2434 = vadd.f32 0.0, %v2433
  %v2435 = vpop.f32.mrf.mxu0
  %2436 = vdwg.mxu0
  %2437 = vmatpush.bf16.msra.mxu0 %v230
  %2438 = vmatpush.bf16.msra.mxu0 %v226
  %2439 = vmatpush.bf16.msra.mxu0 %v222
  %2440 = vmatpush.bf16.msra.mxu0 %v218
  %2441 = vmatpush.bf16.msra.mxu0 %v214
  %2442 = vmatpush.bf16.msra.mxu0 %v210
  %2443 = vmatpush.bf16.msra.mxu0 %v206
  %2444 = vmatpush.bf16.msra.mxu0 %v202
  %2445 = vmatmul.bf16.gmra.mxu0 %v2396
  %v2446 = vpop.f32.mrf.mxu0
  %v2447 = vadd.f32 0.0, %v2446
  %v2448 = vpop.f32.mrf.mxu0
  %2449 = vdwg.mxu0
  %v2454 = vrot.slane %v2408, 2
  %v2455 = vrot.slane %v2421, 2
  %v2456 = vrot.slane %v2434, 2
  %v2457 = vrot.slane %v2447, 2
  %v2458 = vrot.slane %v2408, 3
  %v2459 = vrot.slane %v2421, 3
  %v2460 = vrot.slane %v2434, 3
  %v2461 = vrot.slane %v2447, 3
  %v2462 = vrot.slane %v2408, 4
  %v2463 = vrot.slane %v2421, 4
  %v2464 = vrot.slane %v2434, 4
  %v2465 = vrot.slane %v2447, 4
  %v2466 = vrot.slane %v2408, 5
  %v2467 = vrot.slane %v2421, 5
  %v2468 = vrot.slane %v2434, 5
  %v2469 = vrot.slane %v2447, 5
  %v2470 = vrot.slane %v2408, 6
  %v2471 = vrot.slane %v2421, 6
  %v2472 = vrot.slane %v2434, 6
  %v2473 = vrot.slane %v2447, 6
  %v2474 = vrot.slane %v2408, 7
  %v2475 = vrot.slane %v2421, 7
  %v2476 = vrot.slane %v2434, 7
  %v2477 = vrot.slane %v2447, 7
  %v2478 = vrot.slane %v2408, 1
  %v2479 = vrot.slane %v2421, 1
  %v2480 = vrot.slane %v2434, 1
  %v2481 = vrot.slane %v2447, 1
  %v2514 = vadd.f32 %v68, %v2454
  %v2515 = vadd.f32 %v69, %v2455
  %v2516 = vadd.f32 %v70, %v2456
  %v2517 = vadd.f32 %v71, %v2457
  %v2518 = vadd.f32 %v72, %v2458
  %v2519 = vadd.f32 %v73, %v2459
  %v2520 = vadd.f32 %v74, %v2460
  %v2521 = vadd.f32 %v75, %v2461
  %v2522 = vadd.f32 %v76, %v2462
  %v2523 = vadd.f32 %v77, %v2463
  %v2524 = vadd.f32 %v78, %v2464
  %v2525 = vadd.f32 %v79, %v2465
  %v2526 = vadd.f32 %v80, %v2466
  %v2527 = vadd.f32 %v81, %v2467
  %v2528 = vadd.f32 %v82, %v2468
  %v2529 = vadd.f32 %v83, %v2469
  %v2530 = vadd.f32 %v84, %v2470
  %v2531 = vadd.f32 %v85, %v2471
  %v2532 = vadd.f32 %v86, %v2472
  %v2533 = vadd.f32 %v87, %v2473
  %v2534 = vadd.f32 %v88, %v2474
  %v2535 = vadd.f32 %v89, %v2475
  %v2536 = vadd.f32 %v90, %v2476
  %v2537 = vadd.f32 %v91, %v2477
  %v2538 = vadd.f32 %v92, %v2408
  %v2539 = vadd.f32 %v93, %v2421
  %v2540 = vadd.f32 %v94, %v2434
  %v2541 = vadd.f32 %v95, %v2447
  %v2542 = vadd.f32 %v96, %v2478
  %v2543 = vadd.f32 %v97, %v2479
  %v2544 = vadd.f32 %v98, %v2480
  %v2545 = vadd.f32 %v99, %v2481
  %v2546 = vmul.f32 %v2514, 0.5
  %v2547 = vmul.f32 %v2515, 0.5
  %v2548 = vmul.f32 %v2516, 0.5
  %v2549 = vmul.f32 %v2518, 0.5
  %v2550 = vmul.f32 %v2519, 0.5
  %v2551 = vmul.f32 %v2520, 0.5
  %v2552 = vmul.f32 %v2522, 0.5
  %v2553 = vmul.f32 %v2523, 0.5
  %v2554 = vmul.f32 %v2524, 0.5
  %v2555 = vmul.f32 %v2526, 0.5
  %v2556 = vmul.f32 %v2527, 0.5
  %v2557 = vmul.f32 %v2528, 0.5
  %v2558 = vmul.f32 %v2530, 0.5
  %v2559 = vmul.f32 %v2531, 0.5
  %v2560 = vmul.f32 %v2532, 0.5
  %v2561 = vmul.f32 %v2534, 0.5
  %v2562 = vmul.f32 %v2535, 0.5
  %v2563 = vmul.f32 %v2536, 0.5
  %v2564 = vmul.f32 %v2538, 0.5
  %v2565 = vmul.f32 %v2539, 0.5
  %v2566 = vmul.f32 %v2540, 0.5
  %v2567 = vmul.f32 %v2542, 0.5
  %v2568 = vmul.f32 %v2543, 0.5
  %v2569 = vmul.f32 %v2544, 0.5
  %v2570 = vtanh.pop %v2546
  %v2571 = vtanh.pop %v2547
  %v2572 = vtanh.pop %v2548
  %v2573 = vtanh.pop %v2549
  %v2574 = vtanh.pop %v2550
  %v2575 = vtanh.pop %v2551
  %v2576 = vtanh.pop %v2552
  %v2577 = vtanh.pop %v2553
  %v2578 = vtanh.pop %v2554
  %v2579 = vtanh.pop %v2555
  %v2580 = vtanh.pop %v2556
  %v2581 = vtanh.pop %v2557
  %v2582 = vtanh.pop %v2558
  %v2583 = vtanh.pop %v2559
  %v2584 = vtanh.pop %v2560
  %v2585 = vtanh.pop %v2561
  %v2586 = vtanh.pop %v2562
  %v2587 = vtanh.pop %v2563
  %v2588 = vtanh.pop %v2564
  %v2589 = vtanh.pop %v2565
  %v2590 = vtanh.pop %v2566
  %v2591 = vtanh.pop %v2567
  %v2592 = vtanh.pop %v2568
  %v2593 = vtanh.pop %v2569
  %v2594 = vadd.f32 %v2570, 1.0
  %v2595 = vadd.f32 %v2571, 1.0
  %v2596 = vadd.f32 %v2572, 1.0
  %v2597 = vadd.f32 %v2573, 1.0
  %v2598 = vadd.f32 %v2574, 1.0
  %v2599 = vadd.f32 %v2575, 1.0
  %v2600 = vadd.f32 %v2576, 1.0
  %v2601 = vadd.f32 %v2577, 1.0
  %v2602 = vadd.f32 %v2578, 1.0
  %v2603 = vadd.f32 %v2579, 1.0
  %v2604 = vadd.f32 %v2580, 1.0
  %v2605 = vadd.f32 %v2581, 1.0
  %v2606 = vadd.f32 %v2582, 1.0
  %v2607 = vadd.f32 %v2583, 1.0
  %v2608 = vadd.f32 %v2584, 1.0
  %v2609 = vadd.f32 %v2585, 1.0
  %v2610 = vadd.f32 %v2586, 1.0
  %v2611 = vadd.f32 %v2587, 1.0
  %v2612 = vadd.f32 %v2588, 1.0
  %v2613 = vadd.f32 %v2589, 1.0
  %v2614 = vadd.f32 %v2590, 1.0
  %v2615 = vadd.f32 %v2591, 1.0
  %v2616 = vadd.f32 %v2592, 1.0
  %v2617 = vadd.f32 %v2593, 1.0
  %v2618 = vmul.f32 %v2594, 0.5
  %v2619 = vmul.f32 %v2595, 0.5
  %v2620 = vmul.f32 %v2596, 0.5
  %v2621 = vmul.f32 %v2597, 0.5
  %v2622 = vmul.f32 %v2598, 0.5
  %v2623 = vmul.f32 %v2599, 0.5
  %v2624 = vmul.f32 %v2600, 0.5
  %v2625 = vmul.f32 %v2601, 0.5
  %v2626 = vmul.f32 %v2602, 0.5
  %v2627 = vmul.f32 %v2603, 0.5
  %v2628 = vmul.f32 %v2604, 0.5
  %v2629 = vmul.f32 %v2605, 0.5
  %v2630 = vmul.f32 %v2606, 0.5
  %v2631 = vmul.f32 %v2607, 0.5
  %v2632 = vmul.f32 %v2608, 0.5
  %v2633 = vmul.f32 %v2609, 0.5
  %v2634 = vmul.f32 %v2610, 0.5
  %v2635 = vmul.f32 %v2611, 0.5
  %v2636 = vmul.f32 %v2612, 0.5
  %v2637 = vmul.f32 %v2613, 0.5
  %v2638 = vmul.f32 %v2614, 0.5
  %v2639 = vmul.f32 %v2615, 0.5
  %v2640 = vmul.f32 %v2616, 0.5
  %v2641 = vmul.f32 %v2617, 0.5
  %v2642 = vtanh.pop %v2517
  %v2643 = vtanh.pop %v2521
  %v2644 = vtanh.pop %v2525
  %v2645 = vtanh.pop %v2529
  %v2646 = vtanh.pop %v2533
  %v2647 = vtanh.pop %v2537
  %v2648 = vtanh.pop %v2541
  %v2649 = vtanh.pop %v2545
  %v2658 = vrot.slane %v2334, 7
  %v2659 = vrot.slane %v2335, 7
  %v2660 = vrot.slane %v2336, 7
  %v2661 = vrot.slane %v2337, 7
  %v2662 = vrot.slane %v2338, 7
  %v2663 = vrot.slane %v2339, 7
  %v2664 = vrot.slane %v2340, 7
  %v2665 = vrot.slane %v2341, 7
  %v2674 = vmul.f32 %v2619, %v2658
  %v2675 = vmul.f32 %v2622, %v2659
  %v2676 = vmul.f32 %v2625, %v2660
  %v2677 = vmul.f32 %v2628, %v2661
  %v2678 = vmul.f32 %v2631, %v2662
  %v2679 = vmul.f32 %v2634, %v2663
  %v2680 = vmul.f32 %v2637, %v2664
  %v2681 = vmul.f32 %v2640, %v2665
  %v2682 = vmul.f32 %v2618, %v2642
  %v2683 = vmul.f32 %v2621, %v2643
  %v2684 = vmul.f32 %v2624, %v2644
  %v2685 = vmul.f32 %v2627, %v2645
  %v2686 = vmul.f32 %v2630, %v2646
  %v2687 = vmul.f32 %v2633, %v2647
  %v2688 = vmul.f32 %v2636, %v2648
  %v2689 = vmul.f32 %v2639, %v2649
  %v2690 = vadd.f32 %v2674, %v2682
  %v2691 = vadd.f32 %v2675, %v2683
  %v2692 = vadd.f32 %v2676, %v2684
  %v2693 = vadd.f32 %v2677, %v2685
  %v2694 = vadd.f32 %v2678, %v2686
  %v2695 = vadd.f32 %v2679, %v2687
  %v2696 = vadd.f32 %v2680, %v2688
  %v2697 = vadd.f32 %v2681, %v2689
  %v2698 = vtanh.pop %v2690
  %v2699 = vtanh.pop %v2691
  %v2700 = vtanh.pop %v2692
  %v2701 = vtanh.pop %v2693
  %v2702 = vtanh.pop %v2694
  %v2703 = vtanh.pop %v2695
  %v2704 = vtanh.pop %v2696
  %v2705 = vtanh.pop %v2697
  %v2706 = vmul.f32 %v2620, %v2698
  %v2707 = vmul.f32 %v2623, %v2699
  %v2708 = vmul.f32 %v2626, %v2700
  %v2709 = vmul.f32 %v2629, %v2701
  %v2710 = vmul.f32 %v2632, %v2702
  %v2711 = vmul.f32 %v2635, %v2703
  %v2712 = vmul.f32 %v2638, %v2704
  %v2713 = vmul.f32 %v2641, %v2705
  %v2714 = vpack.c.bf16 %v2706, %v2706
  %v2715 = vpack.c.bf16 %v2707, %v2707
  %v2716 = vpack.c.bf16 %v2708, %v2708
  %v2717 = vpack.c.bf16 %v2709, %v2709
  %v2718 = vpack.c.bf16 %v2710, %v2710
  %v2719 = vpack.c.bf16 %v2711, %v2711
  %v2720 = vpack.c.bf16 %v2712, %v2712
  %v2721 = vpack.c.bf16 %v2713, %v2713
  %v2730 = vunpack.c.l.b16 %v2714
  %v2731 = vunpack.c.l.b16 %v2715
  %v2732 = vunpack.c.l.b16 %v2716
  %v2733 = vunpack.c.l.b16 %v2717
  %v2734 = vunpack.c.l.b16 %v2718
  %v2735 = vunpack.c.l.b16 %v2719
  %v2736 = vunpack.c.l.b16 %v2720
  %v2737 = vunpack.c.l.b16 %v2721
  %v2738 = vrot.slane %v2730, 6
  %v2739 = vrot.slane %v2731, 5
  %v2740 = vsel %vm596, %v2739, %v2738
  %v2741 = vrot.slane %v2732, 4
  %v2742 = vsel %vm599, %v2741, %v2740
  %v2743 = vrot.slane %v2733, 3
  %v2744 = vsel %vm602, %v2743, %v2742
  %v2745 = vrot.slane %v2734, 2
  %v2746 = vsel %vm605, %v2745, %v2744
  %v2747 = vrot.slane %v2735, 1
  %v2748 = vsel %vm608, %v2747, %v2746
  %v2749 = vsel %vm611, %v2736, %v2748
  %v2750 = vrot.slane %v2737, 7
  %v2751 = vsel %vm614, %v2750, %v2749
  %v2752 = vpack.c.b16 %v2751, %v2751
  %2754 = vmatpush.bf16.msra.mxu0 %v227
  %2755 = vmatpush.bf16.msra.mxu0 %v223
  %2756 = vmatpush.bf16.msra.mxu0 %v219
  %2757 = vmatpush.bf16.msra.mxu0 %v215
  %2758 = vmatpush.bf16.msra.mxu0 %v211
  %2759 = vmatpush.bf16.msra.mxu0 %v207
  %2760 = vmatpush.bf16.msra.mxu0 %v203
  %2761 = vmatpush.bf16.msra.mxu0 %v199
  %2762 = vmatmul.bf16.gmra.mxu0 %v2752
  %v2763 = vpop.f32.mrf.mxu0
  %v2764 = vadd.f32 0.0, %v2763
  %v2765 = vpop.f32.mrf.mxu0
  %2766 = vdwg.mxu0
  %2767 = vmatpush.bf16.msra.mxu0 %v228
  %2768 = vmatpush.bf16.msra.mxu0 %v224
  %2769 = vmatpush.bf16.msra.mxu0 %v220
  %2770 = vmatpush.bf16.msra.mxu0 %v216
  %2771 = vmatpush.bf16.msra.mxu0 %v212
  %2772 = vmatpush.bf16.msra.mxu0 %v208
  %2773 = vmatpush.bf16.msra.mxu0 %v204
  %2774 = vmatpush.bf16.msra.mxu0 %v200
  %2775 = vmatmul.bf16.gmra.mxu0 %v2752
  %v2776 = vpop.f32.mrf.mxu0
  %v2777 = vadd.f32 0.0, %v2776
  %v2778 = vpop.f32.mrf.mxu0
  %2779 = vdwg.mxu0
  %2780 = vmatpush.bf16.msra.mxu0 %v229
  %2781 = vmatpush.bf16.msra.mxu0 %v225
  %2782 = vmatpush.bf16.msra.mxu0 %v221
  %2783 = vmatpush.bf16.msra.mxu0 %v217
  %2784 = vmatpush.bf16.msra.mxu0 %v213
  %2785 = vmatpush.bf16.msra.mxu0 %v209
  %2786 = vmatpush.bf16.msra.mxu0 %v205
  %2787 = vmatpush.bf16.msra.mxu0 %v201
  %2788 = vmatmul.bf16.gmra.mxu0 %v2752
  %v2789 = vpop.f32.mrf.mxu0
  %v2790 = vadd.f32 0.0, %v2789
  %v2791 = vpop.f32.mrf.mxu0
  %2792 = vdwg.mxu0
  %2793 = vmatpush.bf16.msra.mxu0 %v230
  %2794 = vmatpush.bf16.msra.mxu0 %v226
  %2795 = vmatpush.bf16.msra.mxu0 %v222
  %2796 = vmatpush.bf16.msra.mxu0 %v218
  %2797 = vmatpush.bf16.msra.mxu0 %v214
  %2798 = vmatpush.bf16.msra.mxu0 %v210
  %2799 = vmatpush.bf16.msra.mxu0 %v206
  %2800 = vmatpush.bf16.msra.mxu0 %v202
  %2801 = vmatmul.bf16.gmra.mxu0 %v2752
  %v2802 = vpop.f32.mrf.mxu0
  %v2803 = vadd.f32 0.0, %v2802
  %v2804 = vpop.f32.mrf.mxu0
  %2805 = vdwg.mxu0
  %v2810 = vrot.slane %v2764, 1
  %v2811 = vrot.slane %v2777, 1
  %v2812 = vrot.slane %v2790, 1
  %v2813 = vrot.slane %v2803, 1
  %v2814 = vrot.slane %v2764, 2
  %v2815 = vrot.slane %v2777, 2
  %v2816 = vrot.slane %v2790, 2
  %v2817 = vrot.slane %v2803, 2
  %v2818 = vrot.slane %v2764, 3
  %v2819 = vrot.slane %v2777, 3
  %v2820 = vrot.slane %v2790, 3
  %v2821 = vrot.slane %v2803, 3
  %v2822 = vrot.slane %v2764, 4
  %v2823 = vrot.slane %v2777, 4
  %v2824 = vrot.slane %v2790, 4
  %v2825 = vrot.slane %v2803, 4
  %v2826 = vrot.slane %v2764, 5
  %v2827 = vrot.slane %v2777, 5
  %v2828 = vrot.slane %v2790, 5
  %v2829 = vrot.slane %v2803, 5
  %v2830 = vrot.slane %v2764, 6
  %v2831 = vrot.slane %v2777, 6
  %v2832 = vrot.slane %v2790, 6
  %v2833 = vrot.slane %v2803, 6
  %v2834 = vrot.slane %v2764, 7
  %v2835 = vrot.slane %v2777, 7
  %v2836 = vrot.slane %v2790, 7
  %v2837 = vrot.slane %v2803, 7
  %v2870 = vadd.f32 %v68, %v2810
  %v2871 = vadd.f32 %v69, %v2811
  %v2872 = vadd.f32 %v70, %v2812
  %v2873 = vadd.f32 %v71, %v2813
  %v2874 = vadd.f32 %v72, %v2814
  %v2875 = vadd.f32 %v73, %v2815
  %v2876 = vadd.f32 %v74, %v2816
  %v2877 = vadd.f32 %v75, %v2817
  %v2878 = vadd.f32 %v76, %v2818
  %v2879 = vadd.f32 %v77, %v2819
  %v2880 = vadd.f32 %v78, %v2820
  %v2881 = vadd.f32 %v79, %v2821
  %v2882 = vadd.f32 %v80, %v2822
  %v2883 = vadd.f32 %v81, %v2823
  %v2884 = vadd.f32 %v82, %v2824
  %v2885 = vadd.f32 %v83, %v2825
  %v2886 = vadd.f32 %v84, %v2826
  %v2887 = vadd.f32 %v85, %v2827
  %v2888 = vadd.f32 %v86, %v2828
  %v2889 = vadd.f32 %v87, %v2829
  %v2890 = vadd.f32 %v88, %v2830
  %v2891 = vadd.f32 %v89, %v2831
  %v2892 = vadd.f32 %v90, %v2832
  %v2893 = vadd.f32 %v91, %v2833
  %v2894 = vadd.f32 %v92, %v2834
  %v2895 = vadd.f32 %v93, %v2835
  %v2896 = vadd.f32 %v94, %v2836
  %v2897 = vadd.f32 %v95, %v2837
  %v2898 = vadd.f32 %v96, %v2764
  %v2899 = vadd.f32 %v97, %v2777
  %v2900 = vadd.f32 %v98, %v2790
  %v2901 = vadd.f32 %v99, %v2803
  %v2902 = vmul.f32 %v2870, 0.5
  %v2903 = vmul.f32 %v2871, 0.5
  %v2904 = vmul.f32 %v2872, 0.5
  %v2905 = vmul.f32 %v2874, 0.5
  %v2906 = vmul.f32 %v2875, 0.5
  %v2907 = vmul.f32 %v2876, 0.5
  %v2908 = vmul.f32 %v2878, 0.5
  %v2909 = vmul.f32 %v2879, 0.5
  %v2910 = vmul.f32 %v2880, 0.5
  %v2911 = vmul.f32 %v2882, 0.5
  %v2912 = vmul.f32 %v2883, 0.5
  %v2913 = vmul.f32 %v2884, 0.5
  %v2914 = vmul.f32 %v2886, 0.5
  %v2915 = vmul.f32 %v2887, 0.5
  %v2916 = vmul.f32 %v2888, 0.5
  %v2917 = vmul.f32 %v2890, 0.5
  %v2918 = vmul.f32 %v2891, 0.5
  %v2919 = vmul.f32 %v2892, 0.5
  %v2920 = vmul.f32 %v2894, 0.5
  %v2921 = vmul.f32 %v2895, 0.5
  %v2922 = vmul.f32 %v2896, 0.5
  %v2923 = vmul.f32 %v2898, 0.5
  %v2924 = vmul.f32 %v2899, 0.5
  %v2925 = vmul.f32 %v2900, 0.5
  %v2926 = vtanh.pop %v2902
  %v2927 = vtanh.pop %v2903
  %v2928 = vtanh.pop %v2904
  %v2929 = vtanh.pop %v2905
  %v2930 = vtanh.pop %v2906
  %v2931 = vtanh.pop %v2907
  %v2932 = vtanh.pop %v2908
  %v2933 = vtanh.pop %v2909
  %v2934 = vtanh.pop %v2910
  %v2935 = vtanh.pop %v2911
  %v2936 = vtanh.pop %v2912
  %v2937 = vtanh.pop %v2913
  %v2938 = vtanh.pop %v2914
  %v2939 = vtanh.pop %v2915
  %v2940 = vtanh.pop %v2916
  %v2941 = vtanh.pop %v2917
  %v2942 = vtanh.pop %v2918
  %v2943 = vtanh.pop %v2919
  %v2944 = vtanh.pop %v2920
  %v2945 = vtanh.pop %v2921
  %v2946 = vtanh.pop %v2922
  %v2947 = vtanh.pop %v2923
  %v2948 = vtanh.pop %v2924
  %v2949 = vtanh.pop %v2925
  %v2950 = vadd.f32 %v2926, 1.0
  %v2951 = vadd.f32 %v2927, 1.0
  %v2952 = vadd.f32 %v2928, 1.0
  %v2953 = vadd.f32 %v2929, 1.0
  %v2954 = vadd.f32 %v2930, 1.0
  %v2955 = vadd.f32 %v2931, 1.0
  %v2956 = vadd.f32 %v2932, 1.0
  %v2957 = vadd.f32 %v2933, 1.0
  %v2958 = vadd.f32 %v2934, 1.0
  %v2959 = vadd.f32 %v2935, 1.0
  %v2960 = vadd.f32 %v2936, 1.0
  %v2961 = vadd.f32 %v2937, 1.0
  %v2962 = vadd.f32 %v2938, 1.0
  %v2963 = vadd.f32 %v2939, 1.0
  %v2964 = vadd.f32 %v2940, 1.0
  %v2965 = vadd.f32 %v2941, 1.0
  %v2966 = vadd.f32 %v2942, 1.0
  %v2967 = vadd.f32 %v2943, 1.0
  %v2968 = vadd.f32 %v2944, 1.0
  %v2969 = vadd.f32 %v2945, 1.0
  %v2970 = vadd.f32 %v2946, 1.0
  %v2971 = vadd.f32 %v2947, 1.0
  %v2972 = vadd.f32 %v2948, 1.0
  %v2973 = vadd.f32 %v2949, 1.0
  %v2974 = vmul.f32 %v2950, 0.5
  %v2975 = vmul.f32 %v2951, 0.5
  %v2976 = vmul.f32 %v2952, 0.5
  %v2977 = vmul.f32 %v2953, 0.5
  %v2978 = vmul.f32 %v2954, 0.5
  %v2979 = vmul.f32 %v2955, 0.5
  %v2980 = vmul.f32 %v2956, 0.5
  %v2981 = vmul.f32 %v2957, 0.5
  %v2982 = vmul.f32 %v2958, 0.5
  %v2983 = vmul.f32 %v2959, 0.5
  %v2984 = vmul.f32 %v2960, 0.5
  %v2985 = vmul.f32 %v2961, 0.5
  %v2986 = vmul.f32 %v2962, 0.5
  %v2987 = vmul.f32 %v2963, 0.5
  %v2988 = vmul.f32 %v2964, 0.5
  %v2989 = vmul.f32 %v2965, 0.5
  %v2990 = vmul.f32 %v2966, 0.5
  %v2991 = vmul.f32 %v2967, 0.5
  %v2992 = vmul.f32 %v2968, 0.5
  %v2993 = vmul.f32 %v2969, 0.5
  %v2994 = vmul.f32 %v2970, 0.5
  %v2995 = vmul.f32 %v2971, 0.5
  %v2996 = vmul.f32 %v2972, 0.5
  %v2997 = vmul.f32 %v2973, 0.5
  %v2998 = vtanh.pop %v2873
  %v2999 = vtanh.pop %v2877
  %v3000 = vtanh.pop %v2881
  %v3001 = vtanh.pop %v2885
  %v3002 = vtanh.pop %v2889
  %v3003 = vtanh.pop %v2893
  %v3004 = vtanh.pop %v2897
  %v3005 = vtanh.pop %v2901
  %v3014 = vrot.slane %v2690, 7
  %v3015 = vrot.slane %v2691, 7
  %v3016 = vrot.slane %v2692, 7
  %v3017 = vrot.slane %v2693, 7
  %v3018 = vrot.slane %v2694, 7
  %v3019 = vrot.slane %v2695, 7
  %v3020 = vrot.slane %v2696, 7
  %v3021 = vrot.slane %v2697, 7
  %v3030 = vmul.f32 %v2975, %v3014
  %v3031 = vmul.f32 %v2978, %v3015
  %v3032 = vmul.f32 %v2981, %v3016
  %v3033 = vmul.f32 %v2984, %v3017
  %v3034 = vmul.f32 %v2987, %v3018
  %v3035 = vmul.f32 %v2990, %v3019
  %v3036 = vmul.f32 %v2993, %v3020
  %v3037 = vmul.f32 %v2996, %v3021
  %v3038 = vmul.f32 %v2974, %v2998
  %v3039 = vmul.f32 %v2977, %v2999
  %v3040 = vmul.f32 %v2980, %v3000
  %v3041 = vmul.f32 %v2983, %v3001
  %v3042 = vmul.f32 %v2986, %v3002
  %v3043 = vmul.f32 %v2989, %v3003
  %v3044 = vmul.f32 %v2992, %v3004
  %v3045 = vmul.f32 %v2995, %v3005
  %v3046 = vadd.f32 %v3030, %v3038
  %v3047 = vadd.f32 %v3031, %v3039
  %v3048 = vadd.f32 %v3032, %v3040
  %v3049 = vadd.f32 %v3033, %v3041
  %v3050 = vadd.f32 %v3034, %v3042
  %v3051 = vadd.f32 %v3035, %v3043
  %v3052 = vadd.f32 %v3036, %v3044
  %v3053 = vadd.f32 %v3037, %v3045
  %v3054 = vtanh.pop %v3046
  %v3055 = vtanh.pop %v3047
  %v3056 = vtanh.pop %v3048
  %v3057 = vtanh.pop %v3049
  %v3058 = vtanh.pop %v3050
  %v3059 = vtanh.pop %v3051
  %v3060 = vtanh.pop %v3052
  %v3061 = vtanh.pop %v3053
  %v3062 = vmul.f32 %v2976, %v3054
  %v3063 = vmul.f32 %v2979, %v3055
  %v3064 = vmul.f32 %v2982, %v3056
  %v3065 = vmul.f32 %v2985, %v3057
  %v3066 = vmul.f32 %v2988, %v3058
  %v3067 = vmul.f32 %v2991, %v3059
  %v3068 = vmul.f32 %v2994, %v3060
  %v3069 = vmul.f32 %v2997, %v3061
  %v3078 = vrot.slane %v3063, 7
  %v3079 = vrot.slane %v3064, 6
  %v3080 = vsel %vm596, %v3079, %v3078
  %v3081 = vrot.slane %v3065, 5
  %v3082 = vsel %vm599, %v3081, %v3080
  %v3083 = vrot.slane %v3066, 4
  %v3084 = vsel %vm602, %v3083, %v3082
  %v3085 = vrot.slane %v3067, 3
  %v3086 = vsel %vm605, %v3085, %v3084
  %v3087 = vrot.slane %v3068, 2
  %v3088 = vsel %vm608, %v3087, %v3086
  %v3089 = vrot.slane %v3069, 1
  %v3090 = vsel %vm611, %v3089, %v3088
  %3093 = vst [vmem:[#allocation2 - $0x7] sm:$0x80] %v3062
  %3094 = vst [vmem:[#allocation2 + $0x1] sm:$0x7f] %v3090
  %v3103 = vrot.slane %v3047, 7
  %v3104 = vrot.slane %v3048, 6
  %v3105 = vsel %vm596, %v3104, %v3103
  %v3106 = vrot.slane %v3049, 5
  %v3107 = vsel %vm599, %v3106, %v3105
  %v3108 = vrot.slane %v3050, 4
  %v3109 = vsel %vm602, %v3108, %v3107
  %v3110 = vrot.slane %v3051, 3
  %v3111 = vsel %vm605, %v3110, %v3109
  %v3112 = vrot.slane %v3052, 2
  %v3113 = vsel %vm608, %v3112, %v3111
  %v3114 = vrot.slane %v3053, 1
  %v3115 = vsel %vm611, %v3114, %v3113
  %3118 = vst [vmem:[#allocation3 - $0x7] sm:$0x80] %v3046
  %3119 = vst [vmem:[#allocation3 + $0x1] sm:$0x7f] %v3115
  %vm3120 = vcmask 1040384
  %v3121 = vsel %vm3120, %v563, %v926
  %v3122 = vsel %vm3120, %v564, %v927
  %v3123 = vsel %vm3120, %v565, %v928
  %v3124 = vsel %vm3120, %v566, %v929
  %v3125 = vsel %vm3120, %v567, %v930
  %v3126 = vsel %vm3120, %v568, %v931
  %v3127 = vsel %vm3120, %v569, %v932
  %v3128 = vsel %vm3120, %v570, %v933
  %vm3129 = vcmask 1041408
  %v3130 = vsel %vm3129, %v3121, %v1282
  %v3131 = vsel %vm3129, %v3122, %v1283
  %v3132 = vsel %vm3129, %v3123, %v1284
  %v3133 = vsel %vm3129, %v3124, %v1285
  %v3134 = vsel %vm3129, %v3125, %v1286
  %v3135 = vsel %vm3129, %v3126, %v1287
  %v3136 = vsel %vm3129, %v3127, %v1288
  %v3137 = vsel %vm3129, %v3128, %v1289
  %vm3138 = vcmask 1042432
  %v3139 = vsel %vm3138, %v3130, %v1638
  %v3140 = vsel %vm3138, %v3131, %v1639
  %v3141 = vsel %vm3138, %v3132, %v1640
  %v3142 = vsel %vm3138, %v3133, %v1641
  %v3143 = vsel %vm3138, %v3134, %v1642
  %v3144 = vsel %vm3138, %v3135, %v1643
  %v3145 = vsel %vm3138, %v3136, %v1644
  %v3146 = vsel %vm3138, %v3137, %v1645
  %vm3147 = vcmask 1043456
  %v3148 = vsel %vm3147, %v3139, %v1994
  %v3149 = vsel %vm3147, %v3140, %v1995
  %v3150 = vsel %vm3147, %v3141, %v1996
  %v3151 = vsel %vm3147, %v3142, %v1997
  %v3152 = vsel %vm3147, %v3143, %v1998
  %v3153 = vsel %vm3147, %v3144, %v1999
  %v3154 = vsel %vm3147, %v3145, %v2000
  %v3155 = vsel %vm3147, %v3146, %v2001
  %vm3156 = vcmask 1044480
  %v3157 = vsel %vm3156, %v3148, %v2350
  %v3158 = vsel %vm3156, %v3149, %v2351
  %v3159 = vsel %vm3156, %v3150, %v2352
  %v3160 = vsel %vm3156, %v3151, %v2353
  %v3161 = vsel %vm3156, %v3152, %v2354
  %v3162 = vsel %vm3156, %v3153, %v2355
  %v3163 = vsel %vm3156, %v3154, %v2356
  %v3164 = vsel %vm3156, %v3155, %v2357
  %vm3165 = vcmask 1045504
  %v3166 = vsel %vm3165, %v3157, %v2706
  %v3167 = vsel %vm3165, %v3158, %v2707
  %v3168 = vsel %vm3165, %v3159, %v2708
  %v3169 = vsel %vm3165, %v3160, %v2709
  %v3170 = vsel %vm3165, %v3161, %v2710
  %v3171 = vsel %vm3165, %v3162, %v2711
  %v3172 = vsel %vm3165, %v3163, %v2712
  %v3173 = vsel %vm3165, %v3164, %v2713
  %vm3174 = vcmask 1046528
  %v3175 = vsel %vm3174, %v3166, %v3062
  %v3176 = vsel %vm3174, %v3167, %v3063
  %v3177 = vsel %vm3174, %v3168, %v3064
  %v3178 = vsel %vm3174, %v3169, %v3065
  %v3179 = vsel %vm3174, %v3170, %v3066
  %v3180 = vsel %vm3174, %v3171, %v3067
  %v3181 = vsel %vm3174, %v3172, %v3068
  %v3182 = vsel %vm3174, %v3173, %v3069
  %3183 = vst [vmem:[%s2] sm:$0xff] %v3175
  %3184 = vst [vmem:[%s2 + $0x8] sm:$0xff] %v3176
  %3185 = vst [vmem:[%s2 + $0x10] sm:$0xff] %v3177
  %3186 = vst [vmem:[%s2 + $0x18] sm:$0xff] %v3178
  %3187 = vst [vmem:[%s2 + $0x20] sm:$0xff] %v3179
  %3188 = vst [vmem:[%s2 + $0x28] sm:$0xff] %v3180
  %3189 = vst [vmem:[%s2 + $0x30] sm:$0xff] %v3181
  %3190 = vst [vmem:[%s2 + $0x38] sm:$0xff] %v3182
  // Predicated region
  $region14: #{snp_lstm_forward.1} parent=0 // pred_check
    %p3191 = pneg %p14
  $region15: #{snp_lstm_forward.1} parent=0 // pred_check_branch
    %3193 = sbr.rel (%p3191) target = $region17
  $region16: #{snp_lstm_forward.1} parent=0 // pred_region
    %3194 = vst [vmem:[%s3 - $0x7] sm:$0x80] %v3062
    %3195 = vst [vmem:[%s3 + $0x1] sm:$0x7f] %v3090
    %3196 = vst [vmem:[%s4 - $0x7] sm:$0x80] %v3046
    %3197 = vst [vmem:[%s4 + $0x1] sm:$0x7f] %v3115
  $region17: #{snp_lstm_forward.1} parent=0 // pred_fallthru
    _
  // Predicated region
  $region18: #{snp_lstm_forward.1} parent=0 // pred_check
    _
  $region19: #{snp_lstm_forward.1} parent=0 // pred_check_branch
    %3199 = sbr.rel (0) target = $region21
  $region20: #{snp_lstm_forward.1} parent=0 // pred_region
    _
  $region21: #{snp_lstm_forward.1} parent=0 // pred_fallthru
    _
  // Predicated region
  $region22: #{snp_lstm_forward.1} parent=0 // pred_check
    _
  $region23: #{snp_lstm_forward.1} parent=0 // pred_check_branch
    %3201 = sbr.rel (0) target = $region25
  $region24: #{snp_lstm_forward.1} parent=0 // pred_region
    _
  $region25: #{snp_lstm_forward.1} parent=0 // pred_fallthru
    _
  // Predicated region
  $region26: #{snp_lstm_forward.1} parent=0 // pred_check
    _
  $region27: #{snp_lstm_forward.1} parent=0 // pred_check_branch
    %3203 = sbr.rel (0) target = $region29
  $region28: #{snp_lstm_forward.1} parent=0 // pred_region
    _
  $region29: #{snp_lstm_forward.1} parent=0 // pred_fallthru
    _
  // Predicated region
  $region30: #{snp_lstm_forward.1} parent=0 // pred_check
    _
  $region31: #{snp_lstm_forward.1} parent=0 // pred_check_branch
    %3205 = sbr.rel (0) target = $region33
  $region32: #{snp_lstm_forward.1} parent=0 // pred_region
    _
  $region33: #{snp_lstm_forward.1} parent=0 // pred_fallthru
    _
  // Predicated region
  $region34: #{snp_lstm_forward.1} parent=0 // pred_check
    _
  $region35: #{snp_lstm_forward.1} parent=0 // pred_check_branch
    %3207 = sbr.rel (0) target = $region37
  $region36: #{snp_lstm_forward.1} parent=0 // pred_region
    _
  $region37: #{snp_lstm_forward.1} parent=0 // pred_fallthru
    _
  // Predicated region
  $region38: #{snp_lstm_forward.1} parent=0 // pred_check
    _
  $region39: #{snp_lstm_forward.1} parent=0 // pred_check_branch
    %3209 = sbr.rel (0) target = $region41
  $region40: #{snp_lstm_forward.1} parent=0 // pred_region
    _
  $region41: #{snp_lstm_forward.1} parent=0 // pred_fallthru
    _

</llo_original>
